<compile_context>
chip_gen: v5e
topology: v5e:2x2
jax: 0.10.0
libtpu: 0.0.40
codegen_flags: <defaults>
</compile_context>

<pallas_src>
import jax
import jax.numpy as jnp
from jax import lax
from jax.experimental import pallas as pl
from jax.experimental.pallas import tpu as pltpu

EPS = 1e-5  # nn.BatchNorm1d default


def _vmem_limit_bytes():
    """~3/4 of physical VMEM (v5e/v6e 128MiB -> 96MiB, v7x 64MiB -> 48MiB)."""
    try:
        cap = int(getattr(pltpu.get_tpu_info(), "vmem_capacity_bytes", 64 << 20))
    except Exception:
        cap = 64 << 20
    return min((cap * 3) // 4, 100 << 20)


def _pick_block_n(n, per_sample_bytes, vmem_limit, target_bytes=1 << 20, max_unroll=8):
    """Samples per grid step: big enough blocks for DMA efficiency, small enough
    for double-buffered VMEM residence and >= min(n,4) grid steps."""
    nb = max(1, target_bytes // max(per_sample_bytes, 1))
    nb = min(nb, max_unroll, n)
    nb = min(nb, max(1, vmem_limit // (6 * max(per_sample_bytes, 1))))
    min_steps = min(n, 4)
    nb = min(nb, max(1, n // min_steps))
    while n % nb:
        nb -= 1
    return max(nb, 1)


def bottleneck1d_pallas(x_ncl, params, *, use_bf16=True):
    """x_ncl: (N, Cin, L) in PyTorch NCL layout. Returns (N, Cin, L) in x's dtype."""
    w1, w2, w3, g1, b1, g2, b2, g3, b3 = params
    n, cin, length = x_ncl.shape
    cmid = w1.shape[0]
    cexp = w3.shape[0]
    assert cexp == cin, "residual add requires in_channels == out_channels*4"

    store_dt = jnp.bfloat16 if use_bf16 else jnp.float32   # inter-stage activations
    comp_dt = jnp.bfloat16 if use_bf16 else jnp.float32    # MXU operand dtype
    f32 = jnp.float32

    # Repack weights so every conv is a plain (C_out, K) @ (K, L) matmul.
    w1m = w1[:, :, 0].astype(comp_dt)          # (Cmid, Cin)
    w2l = w2[:, :, 0].astype(comp_dt)          # tap t=0 -> x[:, j-1]
    w2c = w2[:, :, 1].astype(comp_dt)          # tap t=1 -> x[:, j]
    w2r = w2[:, :, 2].astype(comp_dt)          # tap t=2 -> x[:, j+1]
    w3m = w3[:, :, 0].astype(comp_dt)          # (Cexp, Cmid)
    g1c, b1c = g1.reshape(cmid, 1).astype(f32), b1.reshape(cmid, 1).astype(f32)
    g2c, b2c = g2.reshape(cmid, 1).astype(f32), b2.reshape(cmid, 1).astype(f32)
    g3c, b3c = g3.reshape(cexp, 1).astype(f32), b3.reshape(cexp, 1).astype(f32)

    inv_count = 1.0 / float(n * length)

    io_bpe = x_ncl.dtype.itemsize
    st_bpe = jnp.dtype(store_dt).itemsize
    vmem_limit = _vmem_limit_bytes()
    # heaviest stage (4) streams h2 + identity in and the output out, per sample
    per_sample_bytes = length * (cmid * st_bpe + 2 * cexp * io_bpe)
    nb = _pick_block_n(n, per_sample_bytes, vmem_limit)
    n_blocks = n // nb
    grid = (n_blocks,)

    cparams = pltpu.CompilerParams(
        dimension_semantics=("parallel",),      # shard grid steps across v7x's 2 TCs
        vmem_limit_bytes=vmem_limit,
    )

    def row_spec(c):       # (Nb, C, L) activation block: C on sublanes, L lane-dense
        return pl.BlockSpec((nb, c, length), lambda i: (i, 0, 0))

    def stat_spec(c):      # per-block partial BN stats
        return pl.BlockSpec((1, c, 1), lambda i: (i, 0, 0))

    def full_spec(shape):  # weights / gamma,beta / stat tables, resident across grid
        nd = len(shape)
        return pl.BlockSpec(shape, lambda i, _nd=nd: (0,) * _nd)

    def stat_shape(c):
        return jax.ShapeDtypeStruct((n_blocks, c, 1), f32)

    def fold_bn(s_ref, q_ref, g_ref, b_ref):
        """Reduce per-block partial stats + gamma/beta -> per-channel (scale, shift)."""
        mean = jnp.sum(s_ref[...], axis=0) * inv_count            # (C, 1)
        ex2 = jnp.sum(q_ref[...], axis=0) * inv_count
        var = jnp.maximum(ex2 - mean * mean, 0.0)                 # biased E[x^2]-E[x]^2
        scale = g_ref[...] * lax.rsqrt(var + EPS)
        shift = b_ref[...] - mean * scale
        return scale, shift

    # ---------------- stage 1: conv1 (1x1) + partial BN1 stats ----------------
    def k1(x_ref, w_ref, h1_ref, s_ref, q_ref):
        w = w_ref[...]
        ssum = jnp.zeros((cmid, 1), f32)
        ssq = jnp.zeros((cmid, 1), f32)
        for i in range(nb):                                       # static unroll
            xi = x_ref[i].astype(comp_dt)                         # (Cin, L)
            h = jnp.dot(w, xi, preferred_element_type=f32)        # (Cmid, L)
            hs = h.astype(store_dt)
            h1_ref[i] = hs
            hf = hs.astype(f32)                                   # stats of stored values
            ssum = ssum + jnp.sum(hf, axis=1, keepdims=True)
            ssq = ssq + jnp.sum(hf * hf, axis=1, keepdims=True)
        s_ref[0] = ssum
        q_ref[0] = ssq

    # ---- stage 2: BN1+ReLU, conv2 (k=3 as 3 accumulated matmuls) + BN2 stats ----
    def k2(h1_ref, s1_ref, q1_ref, g_ref, b_ref, wl_ref, wc_ref, wr_ref,
           h2_ref, s_ref, q_ref):
        scale, shift = fold_bn(s1_ref, q1_ref, g_ref, b_ref)
        wl, wc, wr = wl_ref[...], wc_ref[...], wr_ref[...]
        lane = lax.broadcasted_iota(jnp.int32, (cmid, length), 1)
        ssum = jnp.zeros((cmid, 1), f32)
        ssq = jnp.zeros((cmid, 1), f32)
        for i in range(nb):
            a1 = jnp.maximum(h1_ref[i].astype(f32) * scale + shift, 0.0)
            # left[:, j] = a1[:, j-1] (0 at j=0); right[:, j] = a1[:, j+1] (0 at j=L-1)
            left = jnp.where(lane == 0, 0.0, pltpu.roll(a1, 1, axis=1))
            right = jnp.where(lane == length - 1, 0.0,
                              pltpu.roll(a1, length - 1, axis=1))
            h2 = jnp.dot(wc, a1.astype(comp_dt), preferred_element_type=f32)
            h2 = h2 + jnp.dot(wl, left.astype(comp_dt), preferred_element_type=f32)
            h2 = h2 + jnp.dot(wr, right.astype(comp_dt), preferred_element_type=f32)
            hs = h2.astype(store_dt)
            h2_ref[i] = hs
            hf = hs.astype(f32)
            ssum = ssum + jnp.sum(hf, axis=1, keepdims=True)
            ssq = ssq + jnp.sum(hf * hf, axis=1, keepdims=True)
        s_ref[0] = ssum
        q_ref[0] = ssq

    # ----- stage 3: BN2+ReLU, conv3 (1x1 expand) -> only partial BN3 stats -----
    # h3 is never written to HBM; stage 4 recomputes it identically.
    def k3(h2_ref, s2_ref, q2_ref, g_ref, b_ref, w_ref, s_ref, q_ref):
        scale, shift = fold_bn(s2_ref, q2_ref, g_ref, b_ref)
        w = w_ref[...]
        ssum = jnp.zeros((cexp, 1), f32)
        ssq = jnp.zeros((cexp, 1), f32)
        for i in range(nb):
            a2 = jnp.maximum(h2_ref[i].astype(f32) * scale + shift, 0.0)
            h3 = jnp.dot(w, a2.astype(comp_dt), preferred_element_type=f32)
            ssum = ssum + jnp.sum(h3, axis=1, keepdims=True)
            ssq = ssq + jnp.sum(h3 * h3, axis=1, keepdims=True)
        s_ref[0] = ssum
        q_ref[0] = ssq

    # ---- stage 4: BN2+ReLU, conv3 recompute, BN3, residual add, final ReLU ----
    def k4(h2_ref, s2_ref, q2_ref, g2_ref, b2_ref, w_ref,
           s3_ref, q3_ref, g3_ref, b3_ref, x_ref, o_ref):
        sc2, sh2 = fold_bn(s2_ref, q2_ref, g2_ref, b2_ref)
        sc3, sh3 = fold_bn(s3_ref, q3_ref, g3_ref, b3_ref)
        w = w_ref[...]
        for i in range(nb):
            a2 = jnp.maximum(h2_ref[i].astype(f32) * sc2 + sh2, 0.0)
            h3 = jnp.dot(w, a2.astype(comp_dt), preferred_element_type=f32)
            y = h3 * sc3 + sh3 + x_ref[i].astype(f32)
            o_ref[i] = jnp.maximum(y, 0.0).astype(o_ref.dtype)

    # ---- stage 1 ----
    h1, s1, q1 = pl.pallas_call(
        k1, grid=grid,
        in_specs=[row_spec(cin), full_spec((cmid, cin))],
        out_specs=(row_spec(cmid), stat_spec(cmid), stat_spec(cmid)),
        out_shape=(jax.ShapeDtypeStruct((n, cmid, length), store_dt),
                   stat_shape(cmid), stat_shape(cmid)),
        compiler_params=cparams,
        cost_estimate=pl.CostEstimate(
            flops=int(2 * n * length * cin * cmid + 3 * n * length * cmid),
            transcendentals=0,
            bytes_accessed=int(n * length * (cin * io_bpe + cmid * st_bpe))),
    )(x_ncl, w1m)

    # ---- stage 2 ----
    h2, s2, q2 = pl.pallas_call(
        k2, grid=grid,
        in_specs=[row_spec(cmid),
                  full_spec((n_blocks, cmid, 1)), full_spec((n_blocks, cmid, 1)),
                  full_spec((cmid, 1)), full_spec((cmid, 1)),
                  full_spec((cmid, cmid)), full_spec((cmid, cmid)),
                  full_spec((cmid, cmid))],
        out_specs=(row_spec(cmid), stat_spec(cmid), stat_spec(cmid)),
        out_shape=(jax.ShapeDtypeStruct((n, cmid, length), store_dt),
                   stat_shape(cmid), stat_shape(cmid)),
        compiler_params=cparams,
        cost_estimate=pl.CostEstimate(
            flops=int(6 * n * length * cmid * cmid + 12 * n * length * cmid),
            transcendentals=0,
            bytes_accessed=int(2 * n * length * cmid * st_bpe)),
    )(h1, s1, q1, g1c, b1c, w2l, w2c, w2r)

    # ---- stage 3 (stats only, no h3 round-trip) ----
    s3, q3 = pl.pallas_call(
        k3, grid=grid,
        in_specs=[row_spec(cmid),
                  full_spec((n_blocks, cmid, 1)), full_spec((n_blocks, cmid, 1)),
                  full_spec((cmid, 1)), full_spec((cmid, 1)),
                  full_spec((cexp, cmid))],
        out_specs=(stat_spec(cexp), stat_spec(cexp)),
        out_shape=(stat_shape(cexp), stat_shape(cexp)),
        compiler_params=cparams,
        cost_estimate=pl.CostEstimate(
            flops=int(2 * n * length * cmid * cexp + 7 * n * length * cmid),
            transcendentals=0,
            bytes_accessed=int(n * length * cmid * st_bpe)),
    )(h2, s2, q2, g2c, b2c, w3m)

    # ---- stage 4 ----
    out = pl.pallas_call(
        k4, grid=grid,
        in_specs=[row_spec(cmid),
                  full_spec((n_blocks, cmid, 1)), full_spec((n_blocks, cmid, 1)),
                  full_spec((cmid, 1)), full_spec((cmid, 1)),
                  full_spec((cexp, cmid)),
                  full_spec((n_blocks, cexp, 1)), full_spec((n_blocks, cexp, 1)),
                  full_spec((cexp, 1)), full_spec((cexp, 1)),
                  row_spec(cexp)],
        out_specs=row_spec(cexp),
        out_shape=jax.ShapeDtypeStruct((n, cexp, length), x_ncl.dtype),
        compiler_params=cparams,
        cost_estimate=pl.CostEstimate(
            flops=int(2 * n * length * cmid * cexp + 10 * n * length * cexp),
            transcendentals=0,
            bytes_accessed=int(n * length * (cmid * st_bpe + 2 * cexp * io_bpe))),
    )(h2, s2, q2, g2c, b2c, w3m, s3, q3, g3c, b3c, x_ncl)
    return out


def bottleneck1d_ref(x_ncl, params):
    """Pure-JAX reference matching the PyTorch forward (training-mode BN, NCL)."""
    w1, w2, w3, g1, b1, g2, b2, g3, b3 = params

    def conv(x, w, pad):
        return lax.conv_general_dilated(
            x, w, window_strides=(1,), padding=[(pad, pad)],
            dimension_numbers=('NCH', 'OIH', 'NCH'))

    def bn(x, g, b):
        mean = jnp.mean(x, axis=(0, 2), keepdims=True)
        var = jnp.mean((x - mean) ** 2, axis=(0, 2), keepdims=True)
        return (x - mean) / jnp.sqrt(var + EPS) * g[None, :, None] + b[None, :, None]

    h = jax.nn.relu(bn(conv(x_ncl, w1, 0), g1, b1))
    h = jax.nn.relu(bn(conv(h, w2, 1), g2, b2))
    h = bn(conv(h, w3, 0), g3, b3)
    return jax.nn.relu(h + x_ncl)


if __name__ == "__main__":
    key = jax.random.PRNGKey(0)
    N, L = 2, 128                     # L on the lane axis -> lane-dense tiles
    CMID = 8                          # out_channels
    CIN = CMID * 4                    # in_channels == out_channels * expansion
    CEXP = CMID * 4

    ks = jax.random.split(key, 10)
    x = jax.random.normal(ks[0], (N, CIN, L), jnp.float32)

    # Deterministic synthetic parameters (Conv1d weights are OIH, bias=False).
    w1 = 0.2 * jax.random.normal(ks[1], (CMID, CIN, 1), jnp.float32)
    w2 = 0.2 * jax.random.normal(ks[2], (CMID, CMID, 3), jnp.float32)
    w3 = 0.2 * jax.random.normal(ks[3], (CEXP, CMID, 1), jnp.float32)
    g1 = 1.0 + 0.1 * jax.random.normal(ks[4], (CMID,), jnp.float32)
    b1 = 0.1 * jax.random.normal(ks[5], (CMID,), jnp.float32)
    g2 = 1.0 + 0.1 * jax.random.normal(ks[6], (CMID,), jnp.float32)
    b2 = 0.1 * jax.random.normal(ks[7], (CMID,), jnp.float32)
    g3 = 1.0 + 0.1 * jax.random.normal(ks[8], (CEXP,), jnp.float32)
    b3 = 0.1 * jax.random.normal(ks[9], (CEXP,), jnp.float32)
    params = (w1, w2, w3, g1, b1, g2, b2, g3, b3)

    ref = jax.block_until_ready(bottleneck1d_ref(x, params))

    # Default (performance) path: bf16 intermediates + bf16 MXU operands.
    out_bf16 = jax.block_until_ready(jax.jit(bottleneck1d_pallas)(x, params))
    assert out_bf16.shape == x.shape and out_bf16.dtype == x.dtype
    err_bf16 = float(jnp.max(jnp.abs(out_bf16 - ref)))
    assert jnp.allclose(out_bf16, ref, atol=1e-1, rtol=1e-1), err_bf16

    # Exact-precision path: f32 intermediates and operands.
    out_f32 = jax.block_until_ready(
        jax.jit(lambda a, p: bottleneck1d_pallas(a, p, use_bf16=False))(x, params))
    err_f32 = float(jnp.max(jnp.abs(out_f32 - ref)))
    assert jnp.allclose(out_f32, ref, atol=1e-3, rtol=1e-3), err_f32

    print("KERNEL_OK")
</pallas_src>

<mosaic_0001>
module attributes {stable_mosaic.version = 11 : i64} {
  func.func @k2(%arg0: i32, %arg1: memref<1x8x128xbf16, #tpu.memory_space<vmem>>, %arg2: memref<2x8x1xf32, #tpu.memory_space<vmem>>, %arg3: memref<2x8x1xf32, #tpu.memory_space<vmem>>, %arg4: memref<8x1xf32, #tpu.memory_space<vmem>>, %arg5: memref<8x1xf32, #tpu.memory_space<vmem>>, %arg6: memref<8x8xbf16, #tpu.memory_space<vmem>>, %arg7: memref<8x8xbf16, #tpu.memory_space<vmem>>, %arg8: memref<8x8xbf16, #tpu.memory_space<vmem>>, %arg9: memref<1x8x128xbf16, #tpu.memory_space<vmem>>, %arg10: memref<1x8x1xf32, #tpu.memory_space<vmem>>, %arg11: memref<1x8x1xf32, #tpu.memory_space<vmem>>) attributes {dimension_semantics = [#tpu.dimension_semantics<parallel>], iteration_bounds = array<i64: 2>, scalar_prefetch = 0 : i64, scratch_operands = 0 : i64, tpu.core_type = #tpu.core_type<tc>, window_params = [{transform_indices = @transform_0, window_bounds = array<i64: 1, 8, 128>}, {pipeline_mode = #tpu.pipeline_mode<synchronous>, transform_indices = @transform_1, window_bounds = array<i64: 2, 8, 1>}, {pipeline_mode = #tpu.pipeline_mode<synchronous>, transform_indices = @transform_2, window_bounds = array<i64: 2, 8, 1>}, {pipeline_mode = #tpu.pipeline_mode<synchronous>, transform_indices = @transform_3, window_bounds = array<i64: 8, 1>}, {pipeline_mode = #tpu.pipeline_mode<synchronous>, transform_indices = @transform_4, window_bounds = array<i64: 8, 1>}, {pipeline_mode = #tpu.pipeline_mode<synchronous>, transform_indices = @transform_5, window_bounds = array<i64: 8, 8>}, {pipeline_mode = #tpu.pipeline_mode<synchronous>, transform_indices = @transform_6, window_bounds = array<i64: 8, 8>}, {pipeline_mode = #tpu.pipeline_mode<synchronous>, transform_indices = @transform_7, window_bounds = array<i64: 8, 8>}, {transform_indices = @transform_8, window_bounds = array<i64: 1, 8, 128>}, {transform_indices = @transform_9, window_bounds = array<i64: 1, 8, 1>}, {transform_indices = @transform_10, window_bounds = array<i64: 1, 8, 1>}]} {
    %c0 = arith.constant 0 : index
    %c0_0 = arith.constant 0 : index
    %c0_1 = arith.constant 0 : index
    %0 = vector.load %arg2[%c0, %c0_0, %c0_1] : memref<2x8x1xf32, #tpu.memory_space<vmem>>, vector<2x8x1xf32>
    %cst = arith.constant dense<0.000000e+00> : vector<8x1xf32>
    %1 = vector.multi_reduction <add>, %0, %cst [0] : vector<2x8x1xf32> to vector<8x1xf32>
    %cst_2 = arith.constant 3.906250e-03 : f32
    %2 = vector.broadcast %cst_2 : f32 to vector<8x1xf32>
    %3 = arith.mulf %1, %2 : vector<8x1xf32>
    %c0_3 = arith.constant 0 : index
    %c0_4 = arith.constant 0 : index
    %c0_5 = arith.constant 0 : index
    %4 = vector.load %arg3[%c0_3, %c0_4, %c0_5] : memref<2x8x1xf32, #tpu.memory_space<vmem>>, vector<2x8x1xf32>
    %cst_6 = arith.constant dense<0.000000e+00> : vector<8x1xf32>
    %5 = vector.multi_reduction <add>, %4, %cst_6 [0] : vector<2x8x1xf32> to vector<8x1xf32>
    %cst_7 = arith.constant 3.906250e-03 : f32
    %6 = vector.broadcast %cst_7 : f32 to vector<8x1xf32>
    %7 = arith.mulf %5, %6 : vector<8x1xf32>
    %8 = arith.mulf %3, %3 : vector<8x1xf32>
    %9 = arith.subf %7, %8 : vector<8x1xf32>
    %cst_8 = arith.constant 0.000000e+00 : f32
    %10 = vector.broadcast %cst_8 : f32 to vector<8x1xf32>
    %11 = arith.maximumf %9, %10 : vector<8x1xf32>
    %c0_9 = arith.constant 0 : index
    %c0_10 = arith.constant 0 : index
    %12 = vector.load %arg4[%c0_9, %c0_10] : memref<8x1xf32, #tpu.memory_space<vmem>>, vector<8x1xf32>
    %cst_11 = arith.constant 9.99999974E-6 : f32
    %13 = vector.broadcast %cst_11 : f32 to vector<8x1xf32>
    %14 = arith.addf %11, %13 : vector<8x1xf32>
    %15 = math.rsqrt %14 : vector<8x1xf32>
    %16 = arith.mulf %12, %15 : vector<8x1xf32>
    %c0_12 = arith.constant 0 : index
    %c0_13 = arith.constant 0 : index
    %17 = vector.load %arg5[%c0_12, %c0_13] : memref<8x1xf32, #tpu.memory_space<vmem>>, vector<8x1xf32>
    %18 = arith.mulf %3, %16 : vector<8x1xf32>
    %19 = arith.subf %17, %18 : vector<8x1xf32>
    %c0_14 = arith.constant 0 : index
    %c0_15 = arith.constant 0 : index
    %20 = vector.load %arg6[%c0_14, %c0_15] : memref<8x8xbf16, #tpu.memory_space<vmem>>, vector<8x8xbf16>
    %c0_16 = arith.constant 0 : index
    %c0_17 = arith.constant 0 : index
    %21 = vector.load %arg7[%c0_16, %c0_17] : memref<8x8xbf16, #tpu.memory_space<vmem>>, vector<8x8xbf16>
    %c0_18 = arith.constant 0 : index
    %c0_19 = arith.constant 0 : index
    %22 = vector.load %arg8[%c0_18, %c0_19] : memref<8x8xbf16, #tpu.memory_space<vmem>>, vector<8x8xbf16>
    %23 = tpu.iota {dimensions = array<i32: 1>} : vector<8x128xi32>
    %cst_20 = arith.constant 0.000000e+00 : f32
    %24 = vector.broadcast %cst_20 : f32 to vector<8x1xf32>
    %cst_21 = arith.constant 0.000000e+00 : f32
    %25 = vector.broadcast %cst_21 : f32 to vector<8x1xf32>
    %c0_22 = arith.constant 0 : index
    %c0_23 = arith.constant 0 : index
    %c0_24 = arith.constant 0 : index
    %26 = vector.load %arg1[%c0_22, %c0_23, %c0_24] : memref<1x8x128xbf16, #tpu.memory_space<vmem>>, vector<1x8x128xbf16>
    %27 = vector.shape_cast %26 : vector<1x8x128xbf16> to vector<8x128xbf16>
    %28 = arith.extf %27 : vector<8x128xbf16> to vector<8x128xf32>
    %29 = vector.broadcast %16 : vector<8x1xf32> to vector<8x128xf32>
    %30 = arith.mulf %28, %29 : vector<8x128xf32>
    %31 = vector.broadcast %19 : vector<8x1xf32> to vector<8x128xf32>
    %32 = arith.addf %30, %31 : vector<8x128xf32>
    %cst_25 = arith.constant 0.000000e+00 : f32
    %33 = vector.broadcast %cst_25 : f32 to vector<8x128xf32>
    %34 = arith.maximumf %32, %33 : vector<8x128xf32>
    %c0_i32 = arith.constant 0 : i32
    %35 = vector.broadcast %c0_i32 : i32 to vector<8x128xi32>
    %36 = arith.cmpi eq, %23, %35 : vector<8x128xi32>
    %c1_i32 = arith.constant 1 : i32
    %37 = tpu.dynamic_rotate %34 by %c1_i32 dim 1 : vector<8x128xf32>, i32 -> vector<8x128xf32>
    %cst_26 = arith.constant 0.000000e+00 : f32
    %38 = vector.broadcast %cst_26 : f32 to vector<8x128xf32>
    %39 = arith.select %36, %38, %37 : vector<8x128xi1>, vector<8x128xf32>
    %c127_i32 = arith.constant 127 : i32
    %40 = vector.broadcast %c127_i32 : i32 to vector<8x128xi32>
    %41 = arith.cmpi eq, %23, %40 : vector<8x128xi32>
    %c127_i32_27 = arith.constant 127 : i32
    %42 = tpu.dynamic_rotate %34 by %c127_i32_27 dim 1 : vector<8x128xf32>, i32 -> vector<8x128xf32>
    %cst_28 = arith.constant 0.000000e+00 : f32
    %43 = vector.broadcast %cst_28 : f32 to vector<8x128xf32>
    %44 = arith.select %41, %43, %42 : vector<8x128xi1>, vector<8x128xf32>
    %45 = arith.truncf %34 : vector<8x128xf32> to vector<8x128xbf16>
    %cst_29 = arith.constant dense<0.000000e+00> : vector<8x128xf32>
    %46 = tpu.matmul %21, %45, %cst_29 {dimension_numbers = #tpu.dot_dimension_numbers<[1], [0], [0], [1], [0, 0, 1, 1], [], []>} : vector<8x8xbf16>, vector<8x128xbf16>, vector<8x128xf32> -> vector<8x128xf32>
    %47 = arith.truncf %39 : vector<8x128xf32> to vector<8x128xbf16>
    %cst_30 = arith.constant dense<0.000000e+00> : vector<8x128xf32>
    %48 = tpu.matmul %20, %47, %cst_30 {dimension_numbers = #tpu.dot_dimension_numbers<[1], [0], [0], [1], [0, 0, 1, 1], [], []>} : vector<8x8xbf16>, vector<8x128xbf16>, vector<8x128xf32> -> vector<8x128xf32>
    %49 = arith.addf %46, %48 : vector<8x128xf32>
    %50 = arith.truncf %44 : vector<8x128xf32> to vector<8x128xbf16>
    %cst_31 = arith.constant dense<0.000000e+00> : vector<8x128xf32>
    %51 = tpu.matmul %22, %50, %cst_31 {dimension_numbers = #tpu.dot_dimension_numbers<[1], [0], [0], [1], [0, 0, 1, 1], [], []>} : vector<8x8xbf16>, vector<8x128xbf16>, vector<8x128xf32> -> vector<8x128xf32>
    %52 = arith.addf %49, %51 : vector<8x128xf32>
    %53 = arith.truncf %52 : vector<8x128xf32> to vector<8x128xbf16>
    %c0_32 = arith.constant 0 : index
    %c0_33 = arith.constant 0 : index
    %c0_34 = arith.constant 0 : index
    %54 = vector.load %arg9[%c0_32, %c0_33, %c0_34] : memref<1x8x128xbf16, #tpu.memory_space<vmem>>, vector<1x8x128xbf16>
    %55 = vector.shape_cast %54 : vector<1x8x128xbf16> to vector<8x128xbf16>
    %56 = vector.shape_cast %53 : vector<8x128xbf16> to vector<1x8x128xbf16>
    tpu.vector_store %arg9[%c0_32, %c0_33, %c0_34], %56 {strides = array<i32>} : memref<1x8x128xbf16, #tpu.memory_space<vmem>>, vector<1x8x128xbf16>,
    %57 = arith.extf %53 : vector<8x128xbf16> to vector<8x128xf32>
    %cst_35 = arith.constant dense<0.000000e+00> : vector<8xf32>
    %58 = vector.multi_reduction <add>, %57, %cst_35 [1] : vector<8x128xf32> to vector<8xf32>
    %59 = vector.shape_cast %58 : vector<8xf32> to vector<8x1xf32>
    %60 = arith.addf %24, %59 : vector<8x1xf32>
    %61 = arith.mulf %57, %57 : vector<8x128xf32>
    %cst_36 = arith.constant dense<0.000000e+00> : vector<8xf32>
    %62 = vector.multi_reduction <add>, %61, %cst_36 [1] : vector<8x128xf32> to vector<8xf32>
    %63 = vector.shape_cast %62 : vector<8xf32> to vector<8x1xf32>
    %64 = arith.addf %25, %63 : vector<8x1xf32>
    %c0_37 = arith.constant 0 : index
    %c0_38 = arith.constant 0 : index
    %c0_39 = arith.constant 0 : index
    %65 = vector.load %arg10[%c0_37, %c0_38, %c0_39] : memref<1x8x1xf32, #tpu.memory_space<vmem>>, vector<1x8x1xf32>
    %66 = vector.shape_cast %65 : vector<1x8x1xf32> to vector<8x1xf32>
    %67 = vector.shape_cast %60 : vector<8x1xf32> to vector<1x8x1xf32>
    tpu.vector_store %arg10[%c0_37, %c0_38, %c0_39], %67 {strides = array<i32>} : memref<1x8x1xf32, #tpu.memory_space<vmem>>, vector<1x8x1xf32>,
    %c0_40 = arith.constant 0 : index
    %c0_41 = arith.constant 0 : index
    %c0_42 = arith.constant 0 : index
    %68 = vector.load %arg11[%c0_40, %c0_41, %c0_42] : memref<1x8x1xf32, #tpu.memory_space<vmem>>, vector<1x8x1xf32>
    %69 = vector.shape_cast %68 : vector<1x8x1xf32> to vector<8x1xf32>
    %70 = vector.shape_cast %64 : vector<8x1xf32> to vector<1x8x1xf32>
    tpu.vector_store %arg11[%c0_40, %c0_41, %c0_42], %70 {strides = array<i32>} : memref<1x8x1xf32, #tpu.memory_space<vmem>>, vector<1x8x1xf32>,
    return
  }
  func.func @transform_0(%arg0: i32) -> (i32, i32, i32) {
    %c0_i32 = arith.constant 0 : i32
    %c0_i32_0 = arith.constant 0 : i32
    %c0_i32_1 = arith.constant 0 : i32
    return %arg0, %c0_i32, %c0_i32_0 : i32, i32, i32
  }
  func.func @transform_1(%arg0: i32) -> (i32, i32, i32) {
    %c0_i32 = arith.constant 0 : i32
    %c0_i32_0 = arith.constant 0 : i32
    %c0_i32_1 = arith.constant 0 : i32
    %c0_i32_2 = arith.constant 0 : i32
    return %c0_i32, %c0_i32_0, %c0_i32_1 : i32, i32, i32
  }
  func.func @transform_2(%arg0: i32) -> (i32, i32, i32) {
    %c0_i32 = arith.constant 0 : i32
    %c0_i32_0 = arith.constant 0 : i32
    %c0_i32_1 = arith.constant 0 : i32
    %c0_i32_2 = arith.constant 0 : i32
    return %c0_i32, %c0_i32_0, %c0_i32_1 : i32, i32, i32
  }
  func.func @transform_3(%arg0: i32) -> (i32, i32) {
    %c0_i32 = arith.constant 0 : i32
    %c0_i32_0 = arith.constant 0 : i32
    %c0_i32_1 = arith.constant 0 : i32
    return %c0_i32, %c0_i32_0 : i32, i32
  }
  func.func @transform_4(%arg0: i32) -> (i32, i32) {
    %c0_i32 = arith.constant 0 : i32
    %c0_i32_0 = arith.constant 0 : i32
    %c0_i32_1 = arith.constant 0 : i32
    return %c0_i32, %c0_i32_0 : i32, i32
  }
  func.func @transform_5(%arg0: i32) -> (i32, i32) {
    %c0_i32 = arith.constant 0 : i32
    %c0_i32_0 = arith.constant 0 : i32
    %c0_i32_1 = arith.constant 0 : i32
    return %c0_i32, %c0_i32_0 : i32, i32
  }
  func.func @transform_6(%arg0: i32) -> (i32, i32) {
    %c0_i32 = arith.constant 0 : i32
    %c0_i32_0 = arith.constant 0 : i32
    %c0_i32_1 = arith.constant 0 : i32
    return %c0_i32, %c0_i32_0 : i32, i32
  }
  func.func @transform_7(%arg0: i32) -> (i32, i32) {
    %c0_i32 = arith.constant 0 : i32
    %c0_i32_0 = arith.constant 0 : i32
    %c0_i32_1 = arith.constant 0 : i32
    return %c0_i32, %c0_i32_0 : i32, i32
  }
  func.func @transform_8(%arg0: i32) -> (i32, i32, i32) {
    %c0_i32 = arith.constant 0 : i32
    %c0_i32_0 = arith.constant 0 : i32
    %c0_i32_1 = arith.constant 0 : i32
    return %arg0, %c0_i32, %c0_i32_0 : i32, i32, i32
  }
  func.func @transform_9(%arg0: i32) -> (i32, i32, i32) {
    %c0_i32 = arith.constant 0 : i32
    %c0_i32_0 = arith.constant 0 : i32
    %c0_i32_1 = arith.constant 0 : i32
    return %arg0, %c0_i32, %c0_i32_0 : i32, i32, i32
  }
  func.func @transform_10(%arg0: i32) -> (i32, i32, i32) {
    %c0_i32 = arith.constant 0 : i32
    %c0_i32_0 = arith.constant 0 : i32
    %c0_i32_1 = arith.constant 0 : i32
    return %arg0, %c0_i32, %c0_i32_0 : i32, i32, i32
  }
}

module attributes {stable_mosaic.version = 11 : i64} {
  func.func @k3(%arg0: i32, %arg1: memref<1x8x128xbf16, #tpu.memory_space<vmem>>, %arg2: memref<2x8x1xf32, #tpu.memory_space<vmem>>, %arg3: memref<2x8x1xf32, #tpu.memory_space<vmem>>, %arg4: memref<8x1xf32, #tpu.memory_space<vmem>>, %arg5: memref<8x1xf32, #tpu.memory_space<vmem>>, %arg6: memref<32x8xbf16, #tpu.memory_space<vmem>>, %arg7: memref<1x32x1xf32, #tpu.memory_space<vmem>>, %arg8: memref<1x32x1xf32, #tpu.memory_space<vmem>>) attributes {dimension_semantics = [#tpu.dimension_semantics<parallel>], iteration_bounds = array<i64: 2>, scalar_prefetch = 0 : i64, scratch_operands = 0 : i64, tpu.core_type = #tpu.core_type<tc>, window_params = [{transform_indices = @transform_0, window_bounds = array<i64: 1, 8, 128>}, {pipeline_mode = #tpu.pipeline_mode<synchronous>, transform_indices = @transform_1, window_bounds = array<i64: 2, 8, 1>}, {pipeline_mode = #tpu.pipeline_mode<synchronous>, transform_indices = @transform_2, window_bounds = array<i64: 2, 8, 1>}, {pipeline_mode = #tpu.pipeline_mode<synchronous>, transform_indices = @transform_3, window_bounds = array<i64: 8, 1>}, {pipeline_mode = #tpu.pipeline_mode<synchronous>, transform_indices = @transform_4, window_bounds = array<i64: 8, 1>}, {pipeline_mode = #tpu.pipeline_mode<synchronous>, transform_indices = @transform_5, window_bounds = array<i64: 32, 8>}, {transform_indices = @transform_6, window_bounds = array<i64: 1, 32, 1>}, {transform_indices = @transform_7, window_bounds = array<i64: 1, 32, 1>}]} {
    %c0 = arith.constant 0 : index
    %c0_0 = arith.constant 0 : index
    %c0_1 = arith.constant 0 : index
    %0 = vector.load %arg2[%c0, %c0_0, %c0_1] : memref<2x8x1xf32, #tpu.memory_space<vmem>>, vector<2x8x1xf32>
    %cst = arith.constant dense<0.000000e+00> : vector<8x1xf32>
    %1 = vector.multi_reduction <add>, %0, %cst [0] : vector<2x8x1xf32> to vector<8x1xf32>
    %cst_2 = arith.constant 3.906250e-03 : f32
    %2 = vector.broadcast %cst_2 : f32 to vector<8x1xf32>
    %3 = arith.mulf %1, %2 : vector<8x1xf32>
    %c0_3 = arith.constant 0 : index
    %c0_4 = arith.constant 0 : index
    %c0_5 = arith.constant 0 : index
    %4 = vector.load %arg3[%c0_3, %c0_4, %c0_5] : memref<2x8x1xf32, #tpu.memory_space<vmem>>, vector<2x8x1xf32>
    %cst_6 = arith.constant dense<0.000000e+00> : vector<8x1xf32>
    %5 = vector.multi_reduction <add>, %4, %cst_6 [0] : vector<2x8x1xf32> to vector<8x1xf32>
    %cst_7 = arith.constant 3.906250e-03 : f32
    %6 = vector.broadcast %cst_7 : f32 to vector<8x1xf32>
    %7 = arith.mulf %5, %6 : vector<8x1xf32>
    %8 = arith.mulf %3, %3 : vector<8x1xf32>
    %9 = arith.subf %7, %8 : vector<8x1xf32>
    %cst_8 = arith.constant 0.000000e+00 : f32
    %10 = vector.broadcast %cst_8 : f32 to vector<8x1xf32>
    %11 = arith.maximumf %9, %10 : vector<8x1xf32>
    %c0_9 = arith.constant 0 : index
    %c0_10 = arith.constant 0 : index
    %12 = vector.load %arg4[%c0_9, %c0_10] : memref<8x1xf32, #tpu.memory_space<vmem>>, vector<8x1xf32>
    %cst_11 = arith.constant 9.99999974E-6 : f32
    %13 = vector.broadcast %cst_11 : f32 to vector<8x1xf32>
    %14 = arith.addf %11, %13 : vector<8x1xf32>
    %15 = math.rsqrt %14 : vector<8x1xf32>
    %16 = arith.mulf %12, %15 : vector<8x1xf32>
    %c0_12 = arith.constant 0 : index
    %c0_13 = arith.constant 0 : index
    %17 = vector.load %arg5[%c0_12, %c0_13] : memref<8x1xf32, #tpu.memory_space<vmem>>, vector<8x1xf32>
    %18 = arith.mulf %3, %16 : vector<8x1xf32>
    %19 = arith.subf %17, %18 : vector<8x1xf32>
    %c0_14 = arith.constant 0 : index
    %c0_15 = arith.constant 0 : index
    %20 = vector.load %arg6[%c0_14, %c0_15] : memref<32x8xbf16, #tpu.memory_space<vmem>>, vector<32x8xbf16>
    %cst_16 = arith.constant 0.000000e+00 : f32
    %21 = vector.broadcast %cst_16 : f32 to vector<32x1xf32>
    %cst_17 = arith.constant 0.000000e+00 : f32
    %22 = vector.broadcast %cst_17 : f32 to vector<32x1xf32>
    %c0_18 = arith.constant 0 : index
    %c0_19 = arith.constant 0 : index
    %c0_20 = arith.constant 0 : index
    %23 = vector.load %arg1[%c0_18, %c0_19, %c0_20] : memref<1x8x128xbf16, #tpu.memory_space<vmem>>, vector<1x8x128xbf16>
    %24 = vector.shape_cast %23 : vector<1x8x128xbf16> to vector<8x128xbf16>
    %25 = arith.extf %24 : vector<8x128xbf16> to vector<8x128xf32>
    %26 = vector.broadcast %16 : vector<8x1xf32> to vector<8x128xf32>
    %27 = arith.mulf %25, %26 : vector<8x128xf32>
    %28 = vector.broadcast %19 : vector<8x1xf32> to vector<8x128xf32>
    %29 = arith.addf %27, %28 : vector<8x128xf32>
    %cst_21 = arith.constant 0.000000e+00 : f32
    %30 = vector.broadcast %cst_21 : f32 to vector<8x128xf32>
    %31 = arith.maximumf %29, %30 : vector<8x128xf32>
    %32 = arith.truncf %31 : vector<8x128xf32> to vector<8x128xbf16>
    %cst_22 = arith.constant dense<0.000000e+00> : vector<32x128xf32>
    %33 = tpu.matmul %20, %32, %cst_22 {dimension_numbers = #tpu.dot_dimension_numbers<[1], [0], [0], [1], [0, 0, 1, 1], [], []>} : vector<32x8xbf16>, vector<8x128xbf16>, vector<32x128xf32> -> vector<32x128xf32>
    %cst_23 = arith.constant dense<0.000000e+00> : vector<32xf32>
    %34 = vector.multi_reduction <add>, %33, %cst_23 [1] : vector<32x128xf32> to vector<32xf32>
    %35 = vector.shape_cast %34 : vector<32xf32> to vector<32x1xf32>
    %36 = arith.addf %21, %35 : vector<32x1xf32>
    %37 = arith.mulf %33, %33 : vector<32x128xf32>
    %cst_24 = arith.constant dense<0.000000e+00> : vector<32xf32>
    %38 = vector.multi_reduction <add>, %37, %cst_24 [1] : vector<32x128xf32> to vector<32xf32>
    %39 = vector.shape_cast %38 : vector<32xf32> to vector<32x1xf32>
    %40 = arith.addf %22, %39 : vector<32x1xf32>
    %c0_25 = arith.constant 0 : index
    %c0_26 = arith.constant 0 : index
    %c0_27 = arith.constant 0 : index
    %41 = vector.load %arg7[%c0_25, %c0_26, %c0_27] : memref<1x32x1xf32, #tpu.memory_space<vmem>>, vector<1x32x1xf32>
    %42 = vector.shape_cast %41 : vector<1x32x1xf32> to vector<32x1xf32>
    %43 = vector.shape_cast %36 : vector<32x1xf32> to vector<1x32x1xf32>
    tpu.vector_store %arg7[%c0_25, %c0_26, %c0_27], %43 {strides = array<i32>} : memref<1x32x1xf32, #tpu.memory_space<vmem>>, vector<1x32x1xf32>,
    %c0_28 = arith.constant 0 : index
    %c0_29 = arith.constant 0 : index
    %c0_30 = arith.constant 0 : index
    %44 = vector.load %arg8[%c0_28, %c0_29, %c0_30] : memref<1x32x1xf32, #tpu.memory_space<vmem>>, vector<1x32x1xf32>
    %45 = vector.shape_cast %44 : vector<1x32x1xf32> to vector<32x1xf32>
    %46 = vector.shape_cast %40 : vector<32x1xf32> to vector<1x32x1xf32>
    tpu.vector_store %arg8[%c0_28, %c0_29, %c0_30], %46 {strides = array<i32>} : memref<1x32x1xf32, #tpu.memory_space<vmem>>, vector<1x32x1xf32>,
    return
  }
  func.func @transform_0(%arg0: i32) -> (i32, i32, i32) {
    %c0_i32 = arith.constant 0 : i32
    %c0_i32_0 = arith.constant 0 : i32
    %c0_i32_1 = arith.constant 0 : i32
    return %arg0, %c0_i32, %c0_i32_0 : i32, i32, i32
  }
  func.func @transform_1(%arg0: i32) -> (i32, i32, i32) {
    %c0_i32 = arith.constant 0 : i32
    %c0_i32_0 = arith.constant 0 : i32
    %c0_i32_1 = arith.constant 0 : i32
    %c0_i32_2 = arith.constant 0 : i32
    return %c0_i32, %c0_i32_0, %c0_i32_1 : i32, i32, i32
  }
  func.func @transform_2(%arg0: i32) -> (i32, i32, i32) {
    %c0_i32 = arith.constant 0 : i32
    %c0_i32_0 = arith.constant 0 : i32
    %c0_i32_1 = arith.constant 0 : i32
    %c0_i32_2 = arith.constant 0 : i32
    return %c0_i32, %c0_i32_0, %c0_i32_1 : i32, i32, i32
  }
  func.func @transform_3(%arg0: i32) -> (i32, i32) {
    %c0_i32 = arith.constant 0 : i32
    %c0_i32_0 = arith.constant 0 : i32
    %c0_i32_1 = arith.constant 0 : i32
    return %c0_i32, %c0_i32_0 : i32, i32
  }
  func.func @transform_4(%arg0: i32) -> (i32, i32) {
    %c0_i32 = arith.constant 0 : i32
    %c0_i32_0 = arith.constant 0 : i32
    %c0_i32_1 = arith.constant 0 : i32
    return %c0_i32, %c0_i32_0 : i32, i32
  }
  func.func @transform_5(%arg0: i32) -> (i32, i32) {
    %c0_i32 = arith.constant 0 : i32
    %c0_i32_0 = arith.constant 0 : i32
    %c0_i32_1 = arith.constant 0 : i32
    return %c0_i32, %c0_i32_0 : i32, i32
  }
  func.func @transform_6(%arg0: i32) -> (i32, i32, i32) {
    %c0_i32 = arith.constant 0 : i32
    %c0_i32_0 = arith.constant 0 : i32
    %c0_i32_1 = arith.constant 0 : i32
    return %arg0, %c0_i32, %c0_i32_0 : i32, i32, i32
  }
  func.func @transform_7(%arg0: i32) -> (i32, i32, i32) {
    %c0_i32 = arith.constant 0 : i32
    %c0_i32_0 = arith.constant 0 : i32
    %c0_i32_1 = arith.constant 0 : i32
    return %arg0, %c0_i32, %c0_i32_0 : i32, i32, i32
  }
}

module attributes {stable_mosaic.version = 11 : i64} {
  func.func @k4(%arg0: i32, %arg1: memref<1x8x128xbf16, #tpu.memory_space<vmem>>, %arg2: memref<2x8x1xf32, #tpu.memory_space<vmem>>, %arg3: memref<2x8x1xf32, #tpu.memory_space<vmem>>, %arg4: memref<8x1xf32, #tpu.memory_space<vmem>>, %arg5: memref<8x1xf32, #tpu.memory_space<vmem>>, %arg6: memref<32x8xbf16, #tpu.memory_space<vmem>>, %arg7: memref<2x32x1xf32, #tpu.memory_space<vmem>>, %arg8: memref<2x32x1xf32, #tpu.memory_space<vmem>>, %arg9: memref<32x1xf32, #tpu.memory_space<vmem>>, %arg10: memref<32x1xf32, #tpu.memory_space<vmem>>, %arg11: memref<1x32x128xf32, #tpu.memory_space<vmem>>, %arg12: memref<1x32x128xf32, #tpu.memory_space<vmem>>) attributes {dimension_semantics = [#tpu.dimension_semantics<parallel>], iteration_bounds = array<i64: 2>, scalar_prefetch = 0 : i64, scratch_operands = 0 : i64, tpu.core_type = #tpu.core_type<tc>, window_params = [{transform_indices = @transform_0, window_bounds = array<i64: 1, 8, 128>}, {pipeline_mode = #tpu.pipeline_mode<synchronous>, transform_indices = @transform_1, window_bounds = array<i64: 2, 8, 1>}, {pipeline_mode = #tpu.pipeline_mode<synchronous>, transform_indices = @transform_2, window_bounds = array<i64: 2, 8, 1>}, {pipeline_mode = #tpu.pipeline_mode<synchronous>, transform_indices = @transform_3, window_bounds = array<i64: 8, 1>}, {pipeline_mode = #tpu.pipeline_mode<synchronous>, transform_indices = @transform_4, window_bounds = array<i64: 8, 1>}, {pipeline_mode = #tpu.pipeline_mode<synchronous>, transform_indices = @transform_5, window_bounds = array<i64: 32, 8>}, {pipeline_mode = #tpu.pipeline_mode<synchronous>, transform_indices = @transform_6, window_bounds = array<i64: 2, 32, 1>}, {pipeline_mode = #tpu.pipeline_mode<synchronous>, transform_indices = @transform_7, window_bounds = array<i64: 2, 32, 1>}, {pipeline_mode = #tpu.pipeline_mode<synchronous>, transform_indices = @transform_8, window_bounds = array<i64: 32, 1>}, {pipeline_mode = #tpu.pipeline_mode<synchronous>, transform_indices = @transform_9, window_bounds = array<i64: 32, 1>}, {transform_indices = @transform_10, window_bounds = array<i64: 1, 32, 128>}, {transform_indices = @transform_11, window_bounds = array<i64: 1, 32, 128>}]} {
    %c0 = arith.constant 0 : index
    %c0_0 = arith.constant 0 : index
    %c0_1 = arith.constant 0 : index
    %0 = vector.load %arg2[%c0, %c0_0, %c0_1] : memref<2x8x1xf32, #tpu.memory_space<vmem>>, vector<2x8x1xf32>
    %cst = arith.constant dense<0.000000e+00> : vector<8x1xf32>
    %1 = vector.multi_reduction <add>, %0, %cst [0] : vector<2x8x1xf32> to vector<8x1xf32>
    %cst_2 = arith.constant 3.906250e-03 : f32
    %2 = vector.broadcast %cst_2 : f32 to vector<8x1xf32>
    %3 = arith.mulf %1, %2 : vector<8x1xf32>
    %c0_3 = arith.constant 0 : index
    %c0_4 = arith.constant 0 : index
    %c0_5 = arith.constant 0 : index
    %4 = vector.load %arg3[%c0_3, %c0_4, %c0_5] : memref<2x8x1xf32, #tpu.memory_space<vmem>>, vector<2x8x1xf32>
    %cst_6 = arith.constant dense<0.000000e+00> : vector<8x1xf32>
    %5 = vector.multi_reduction <add>, %4, %cst_6 [0] : vector<2x8x1xf32> to vector<8x1xf32>
    %cst_7 = arith.constant 3.906250e-03 : f32
    %6 = vector.broadcast %cst_7 : f32 to vector<8x1xf32>
    %7 = arith.mulf %5, %6 : vector<8x1xf32>
    %8 = arith.mulf %3, %3 : vector<8x1xf32>
    %9 = arith.subf %7, %8 : vector<8x1xf32>
    %cst_8 = arith.constant 0.000000e+00 : f32
    %10 = vector.broadcast %cst_8 : f32 to vector<8x1xf32>
    %11 = arith.maximumf %9, %10 : vector<8x1xf32>
    %c0_9 = arith.constant 0 : index
    %c0_10 = arith.constant 0 : index
    %12 = vector.load %arg4[%c0_9, %c0_10] : memref<8x1xf32, #tpu.memory_space<vmem>>, vector<8x1xf32>
    %cst_11 = arith.constant 9.99999974E-6 : f32
    %13 = vector.broadcast %cst_11 : f32 to vector<8x1xf32>
    %14 = arith.addf %11, %13 : vector<8x1xf32>
    %15 = math.rsqrt %14 : vector<8x1xf32>
    %16 = arith.mulf %12, %15 : vector<8x1xf32>
    %c0_12 = arith.constant 0 : index
    %c0_13 = arith.constant 0 : index
    %17 = vector.load %arg5[%c0_12, %c0_13] : memref<8x1xf32, #tpu.memory_space<vmem>>, vector<8x1xf32>
    %18 = arith.mulf %3, %16 : vector<8x1xf32>
    %19 = arith.subf %17, %18 : vector<8x1xf32>
    %c0_14 = arith.constant 0 : index
    %c0_15 = arith.constant 0 : index
    %c0_16 = arith.constant 0 : index
    %20 = vector.load %arg7[%c0_14, %c0_15, %c0_16] : memref<2x32x1xf32, #tpu.memory_space<vmem>>, vector<2x32x1xf32>
    %cst_17 = arith.constant dense<0.000000e+00> : vector<32x1xf32>
    %21 = vector.multi_reduction <add>, %20, %cst_17 [0] : vector<2x32x1xf32> to vector<32x1xf32>
    %cst_18 = arith.constant 3.906250e-03 : f32
    %22 = vector.broadcast %cst_18 : f32 to vector<32x1xf32>
    %23 = arith.mulf %21, %22 : vector<32x1xf32>
    %c0_19 = arith.constant 0 : index
    %c0_20 = arith.constant 0 : index
    %c0_21 = arith.constant 0 : index
    %24 = vector.load %arg8[%c0_19, %c0_20, %c0_21] : memref<2x32x1xf32, #tpu.memory_space<vmem>>, vector<2x32x1xf32>
    %cst_22 = arith.constant dense<0.000000e+00> : vector<32x1xf32>
    %25 = vector.multi_reduction <add>, %24, %cst_22 [0] : vector<2x32x1xf32> to vector<32x1xf32>
    %cst_23 = arith.constant 3.906250e-03 : f32
    %26 = vector.broadcast %cst_23 : f32 to vector<32x1xf32>
    %27 = arith.mulf %25, %26 : vector<32x1xf32>
    %28 = arith.mulf %23, %23 : vector<32x1xf32>
    %29 = arith.subf %27, %28 : vector<32x1xf32>
    %cst_24 = arith.constant 0.000000e+00 : f32
    %30 = vector.broadcast %cst_24 : f32 to vector<32x1xf32>
    %31 = arith.maximumf %29, %30 : vector<32x1xf32>
    %c0_25 = arith.constant 0 : index
    %c0_26 = arith.constant 0 : index
    %32 = vector.load %arg9[%c0_25, %c0_26] : memref<32x1xf32, #tpu.memory_space<vmem>>, vector<32x1xf32>
    %cst_27 = arith.constant 9.99999974E-6 : f32
    %33 = vector.broadcast %cst_27 : f32 to vector<32x1xf32>
    %34 = arith.addf %31, %33 : vector<32x1xf32>
    %35 = math.rsqrt %34 : vector<32x1xf32>
    %36 = arith.mulf %32, %35 : vector<32x1xf32>
    %c0_28 = arith.constant 0 : index
    %c0_29 = arith.constant 0 : index
    %37 = vector.load %arg10[%c0_28, %c0_29] : memref<32x1xf32, #tpu.memory_space<vmem>>, vector<32x1xf32>
    %38 = arith.mulf %23, %36 : vector<32x1xf32>
    %39 = arith.subf %37, %38 : vector<32x1xf32>
    %c0_30 = arith.constant 0 : index
    %c0_31 = arith.constant 0 : index
    %40 = vector.load %arg6[%c0_30, %c0_31] : memref<32x8xbf16, #tpu.memory_space<vmem>>, vector<32x8xbf16>
    %c0_32 = arith.constant 0 : index
    %c0_33 = arith.constant 0 : index
    %c0_34 = arith.constant 0 : index
    %41 = vector.load %arg1[%c0_32, %c0_33, %c0_34] : memref<1x8x128xbf16, #tpu.memory_space<vmem>>, vector<1x8x128xbf16>
    %42 = vector.shape_cast %41 : vector<1x8x128xbf16> to vector<8x128xbf16>
    %43 = arith.extf %42 : vector<8x128xbf16> to vector<8x128xf32>
    %44 = vector.broadcast %16 : vector<8x1xf32> to vector<8x128xf32>
    %45 = arith.mulf %43, %44 : vector<8x128xf32>
    %46 = vector.broadcast %19 : vector<8x1xf32> to vector<8x128xf32>
    %47 = arith.addf %45, %46 : vector<8x128xf32>
    %cst_35 = arith.constant 0.000000e+00 : f32
    %48 = vector.broadcast %cst_35 : f32 to vector<8x128xf32>
    %49 = arith.maximumf %47, %48 : vector<8x128xf32>
    %50 = arith.truncf %49 : vector<8x128xf32> to vector<8x128xbf16>
    %cst_36 = arith.constant dense<0.000000e+00> : vector<32x128xf32>
    %51 = tpu.matmul %40, %50, %cst_36 {dimension_numbers = #tpu.dot_dimension_numbers<[1], [0], [0], [1], [0, 0, 1, 1], [], []>} : vector<32x8xbf16>, vector<8x128xbf16>, vector<32x128xf32> -> vector<32x128xf32>
    %52 = vector.broadcast %36 : vector<32x1xf32> to vector<32x128xf32>
    %53 = arith.mulf %51, %52 : vector<32x128xf32>
    %54 = vector.broadcast %39 : vector<32x1xf32> to vector<32x128xf32>
    %55 = arith.addf %53, %54 : vector<32x128xf32>
    %c0_37 = arith.constant 0 : index
    %c0_38 = arith.constant 0 : index
    %c0_39 = arith.constant 0 : index
    %56 = vector.load %arg11[%c0_37, %c0_38, %c0_39] : memref<1x32x128xf32, #tpu.memory_space<vmem>>, vector<1x32x128xf32>
    %57 = vector.shape_cast %56 : vector<1x32x128xf32> to vector<32x128xf32>
    %58 = arith.addf %55, %57 : vector<32x128xf32>
    %cst_40 = arith.constant 0.000000e+00 : f32
    %59 = vector.broadcast %cst_40 : f32 to vector<32x128xf32>
    %60 = arith.maximumf %58, %59 : vector<32x128xf32>
    %c0_41 = arith.constant 0 : index
    %c0_42 = arith.constant 0 : index
    %c0_43 = arith.constant 0 : index
    %61 = vector.load %arg12[%c0_41, %c0_42, %c0_43] : memref<1x32x128xf32, #tpu.memory_space<vmem>>, vector<1x32x128xf32>
    %62 = vector.shape_cast %61 : vector<1x32x128xf32> to vector<32x128xf32>
    %63 = vector.shape_cast %60 : vector<32x128xf32> to vector<1x32x128xf32>
    tpu.vector_store %arg12[%c0_41, %c0_42, %c0_43], %63 {strides = array<i32>} : memref<1x32x128xf32, #tpu.memory_space<vmem>>, vector<1x32x128xf32>,
    return
  }
  func.func @transform_0(%arg0: i32) -> (i32, i32, i32) {
    %c0_i32 = arith.constant 0 : i32
    %c0_i32_0 = arith.constant 0 : i32
    %c0_i32_1 = arith.constant 0 : i32
    return %arg0, %c0_i32, %c0_i32_0 : i32, i32, i32
  }
  func.func @transform_1(%arg0: i32) -> (i32, i32, i32) {
    %c0_i32 = arith.constant 0 : i32
    %c0_i32_0 = arith.constant 0 : i32
    %c0_i32_1 = arith.constant 0 : i32
    %c0_i32_2 = arith.constant 0 : i32
    return %c0_i32, %c0_i32_0, %c0_i32_1 : i32, i32, i32
  }
  func.func @transform_2(%arg0: i32) -> (i32, i32, i32) {
    %c0_i32 = arith.constant 0 : i32
    %c0_i32_0 = arith.constant 0 : i32
    %c0_i32_1 = arith.constant 0 : i32
    %c0_i32_2 = arith.constant 0 : i32
    return %c0_i32, %c0_i32_0, %c0_i32_1 : i32, i32, i32
  }
  func.func @transform_3(%arg0: i32) -> (i32, i32) {
    %c0_i32 = arith.constant 0 : i32
    %c0_i32_0 = arith.constant 0 : i32
    %c0_i32_1 = arith.constant 0 : i32
    return %c0_i32, %c0_i32_0 : i32, i32
  }
  func.func @transform_4(%arg0: i32) -> (i32, i32) {
    %c0_i32 = arith.constant 0 : i32
    %c0_i32_0 = arith.constant 0 : i32
    %c0_i32_1 = arith.constant 0 : i32
    return %c0_i32, %c0_i32_0 : i32, i32
  }
  func.func @transform_5(%arg0: i32) -> (i32, i32) {
    %c0_i32 = arith.constant 0 : i32
    %c0_i32_0 = arith.constant 0 : i32
    %c0_i32_1 = arith.constant 0 : i32
    return %c0_i32, %c0_i32_0 : i32, i32
  }
  func.func @transform_6(%arg0: i32) -> (i32, i32, i32) {
    %c0_i32 = arith.constant 0 : i32
    %c0_i32_0 = arith.constant 0 : i32
    %c0_i32_1 = arith.constant 0 : i32
    %c0_i32_2 = arith.constant 0 : i32
    return %c0_i32, %c0_i32_0, %c0_i32_1 : i32, i32, i32
  }
  func.func @transform_7(%arg0: i32) -> (i32, i32, i32) {
    %c0_i32 = arith.constant 0 : i32
    %c0_i32_0 = arith.constant 0 : i32
    %c0_i32_1 = arith.constant 0 : i32
    %c0_i32_2 = arith.constant 0 : i32
    return %c0_i32, %c0_i32_0, %c0_i32_1 : i32, i32, i32
  }
  func.func @transform_8(%arg0: i32) -> (i32, i32) {
    %c0_i32 = arith.constant 0 : i32
    %c0_i32_0 = arith.constant 0 : i32
    %c0_i32_1 = arith.constant 0 : i32
    return %c0_i32, %c0_i32_0 : i32, i32
  }
  func.func @transform_9(%arg0: i32) -> (i32, i32) {
    %c0_i32 = arith.constant 0 : i32
    %c0_i32_0 = arith.constant 0 : i32
    %c0_i32_1 = arith.constant 0 : i32
    return %c0_i32, %c0_i32_0 : i32, i32
  }
  func.func @transform_10(%arg0: i32) -> (i32, i32, i32) {
    %c0_i32 = arith.constant 0 : i32
    %c0_i32_0 = arith.constant 0 : i32
    %c0_i32_1 = arith.constant 0 : i32
    return %arg0, %c0_i32, %c0_i32_0 : i32, i32, i32
  }
  func.func @transform_11(%arg0: i32) -> (i32, i32, i32) {
    %c0_i32 = arith.constant 0 : i32
    %c0_i32_0 = arith.constant 0 : i32
    %c0_i32_1 = arith.constant 0 : i32
    return %arg0, %c0_i32, %c0_i32_0 : i32, i32, i32
  }
}

module attributes {stable_mosaic.version = 11 : i64} {
  func.func @k1(%arg0: i32, %arg1: memref<1x32x128xf32, #tpu.memory_space<vmem>>, %arg2: memref<8x32xbf16, #tpu.memory_space<vmem>>, %arg3: memref<1x8x128xbf16, #tpu.memory_space<vmem>>, %arg4: memref<1x8x1xf32, #tpu.memory_space<vmem>>, %arg5: memref<1x8x1xf32, #tpu.memory_space<vmem>>) attributes {dimension_semantics = [#tpu.dimension_semantics<parallel>], iteration_bounds = array<i64: 2>, scalar_prefetch = 0 : i64, scratch_operands = 0 : i64, tpu.core_type = #tpu.core_type<tc>, window_params = [{transform_indices = @transform_0, window_bounds = array<i64: 1, 32, 128>}, {pipeline_mode = #tpu.pipeline_mode<synchronous>, transform_indices = @transform_1, window_bounds = array<i64: 8, 32>}, {transform_indices = @transform_2, window_bounds = array<i64: 1, 8, 128>}, {transform_indices = @transform_3, window_bounds = array<i64: 1, 8, 1>}, {transform_indices = @transform_4, window_bounds = array<i64: 1, 8, 1>}]} {
    %c0 = arith.constant 0 : index
    %c0_0 = arith.constant 0 : index
    %0 = vector.load %arg2[%c0, %c0_0] : memref<8x32xbf16, #tpu.memory_space<vmem>>, vector<8x32xbf16>
    %cst = arith.constant 0.000000e+00 : f32
    %1 = vector.broadcast %cst : f32 to vector<8x1xf32>
    %cst_1 = arith.constant 0.000000e+00 : f32
    %2 = vector.broadcast %cst_1 : f32 to vector<8x1xf32>
    %c0_2 = arith.constant 0 : index
    %c0_3 = arith.constant 0 : index
    %c0_4 = arith.constant 0 : index
    %3 = vector.load %arg1[%c0_2, %c0_3, %c0_4] : memref<1x32x128xf32, #tpu.memory_space<vmem>>, vector<1x32x128xf32>
    %4 = vector.shape_cast %3 : vector<1x32x128xf32> to vector<32x128xf32>
    %5 = arith.truncf %4 : vector<32x128xf32> to vector<32x128xbf16>
    %cst_5 = arith.constant dense<0.000000e+00> : vector<8x128xf32>
    %6 = tpu.matmul %0, %5, %cst_5 {dimension_numbers = #tpu.dot_dimension_numbers<[1], [0], [0], [1], [0, 0, 1, 1], [], []>} : vector<8x32xbf16>, vector<32x128xbf16>, vector<8x128xf32> -> vector<8x128xf32>
    %7 = arith.truncf %6 : vector<8x128xf32> to vector<8x128xbf16>
    %c0_6 = arith.constant 0 : index
    %c0_7 = arith.constant 0 : index
    %c0_8 = arith.constant 0 : index
    %8 = vector.load %arg3[%c0_6, %c0_7, %c0_8] : memref<1x8x128xbf16, #tpu.memory_space<vmem>>, vector<1x8x128xbf16>
    %9 = vector.shape_cast %8 : vector<1x8x128xbf16> to vector<8x128xbf16>
    %10 = vector.shape_cast %7 : vector<8x128xbf16> to vector<1x8x128xbf16>
    tpu.vector_store %arg3[%c0_6, %c0_7, %c0_8], %10 {strides = array<i32>} : memref<1x8x128xbf16, #tpu.memory_space<vmem>>, vector<1x8x128xbf16>,
    %11 = arith.extf %7 : vector<8x128xbf16> to vector<8x128xf32>
    %cst_9 = arith.constant dense<0.000000e+00> : vector<8xf32>
    %12 = vector.multi_reduction <add>, %11, %cst_9 [1] : vector<8x128xf32> to vector<8xf32>
    %13 = vector.shape_cast %12 : vector<8xf32> to vector<8x1xf32>
    %14 = arith.addf %1, %13 : vector<8x1xf32>
    %15 = arith.mulf %11, %11 : vector<8x128xf32>
    %cst_10 = arith.constant dense<0.000000e+00> : vector<8xf32>
    %16 = vector.multi_reduction <add>, %15, %cst_10 [1] : vector<8x128xf32> to vector<8xf32>
    %17 = vector.shape_cast %16 : vector<8xf32> to vector<8x1xf32>
    %18 = arith.addf %2, %17 : vector<8x1xf32>
    %c0_11 = arith.constant 0 : index
    %c0_12 = arith.constant 0 : index
    %c0_13 = arith.constant 0 : index
    %19 = vector.load %arg4[%c0_11, %c0_12, %c0_13] : memref<1x8x1xf32, #tpu.memory_space<vmem>>, vector<1x8x1xf32>
    %20 = vector.shape_cast %19 : vector<1x8x1xf32> to vector<8x1xf32>
    %21 = vector.shape_cast %14 : vector<8x1xf32> to vector<1x8x1xf32>
    tpu.vector_store %arg4[%c0_11, %c0_12, %c0_13], %21 {strides = array<i32>} : memref<1x8x1xf32, #tpu.memory_space<vmem>>, vector<1x8x1xf32>,
    %c0_14 = arith.constant 0 : index
    %c0_15 = arith.constant 0 : index
    %c0_16 = arith.constant 0 : index
    %22 = vector.load %arg5[%c0_14, %c0_15, %c0_16] : memref<1x8x1xf32, #tpu.memory_space<vmem>>, vector<1x8x1xf32>
    %23 = vector.shape_cast %22 : vector<1x8x1xf32> to vector<8x1xf32>
    %24 = vector.shape_cast %18 : vector<8x1xf32> to vector<1x8x1xf32>
    tpu.vector_store %arg5[%c0_14, %c0_15, %c0_16], %24 {strides = array<i32>} : memref<1x8x1xf32, #tpu.memory_space<vmem>>, vector<1x8x1xf32>,
    return
  }
  func.func @transform_0(%arg0: i32) -> (i32, i32, i32) {
    %c0_i32 = arith.constant 0 : i32
    %c0_i32_0 = arith.constant 0 : i32
    %c0_i32_1 = arith.constant 0 : i32
    return %arg0, %c0_i32, %c0_i32_0 : i32, i32, i32
  }
  func.func @transform_1(%arg0: i32) -> (i32, i32) {
    %c0_i32 = arith.constant 0 : i32
    %c0_i32_0 = arith.constant 0 : i32
    %c0_i32_1 = arith.constant 0 : i32
    return %c0_i32, %c0_i32_0 : i32, i32
  }
  func.func @transform_2(%arg0: i32) -> (i32, i32, i32) {
    %c0_i32 = arith.constant 0 : i32
    %c0_i32_0 = arith.constant 0 : i32
    %c0_i32_1 = arith.constant 0 : i32
    return %arg0, %c0_i32, %c0_i32_0 : i32, i32, i32
  }
  func.func @transform_3(%arg0: i32) -> (i32, i32, i32) {
    %c0_i32 = arith.constant 0 : i32
    %c0_i32_0 = arith.constant 0 : i32
    %c0_i32_1 = arith.constant 0 : i32
    return %arg0, %c0_i32, %c0_i32_0 : i32, i32, i32
  }
  func.func @transform_4(%arg0: i32) -> (i32, i32, i32) {
    %c0_i32 = arith.constant 0 : i32
    %c0_i32_0 = arith.constant 0 : i32
    %c0_i32_1 = arith.constant 0 : i32
    return %arg0, %c0_i32, %c0_i32_0 : i32, i32, i32
  }
}

</mosaic_0001>

<llo_original>
// kernel: bottleneck1d_pallas.5
$region0: #{bottleneck1d_pallas.5}
  #allocation0 [shape = 'u32[]', space=smem, size = 0x4, offset = 0x4, fixed_abs, tag = 'smem constant byte address 0x4 - core index']
  #allocation1 [shape = 'u32[72,128]{1,0:T(1,128)}', space=vmem, size = 0x9000, scoped, tag = 'internal scratch']
  %s0 = inlined_call_operand.vmem [shape: bf16[2,8,128], index: 0, kind: input, shape index: {}]
  %s1 = inlined_call_operand.vmem [shape: f32[2,8,1], index: 1, kind: input, shape index: {}]
  %s2 = inlined_call_operand.vmem [shape: f32[2,8,1], index: 2, kind: input, shape index: {}]
  %s3 = inlined_call_operand.vmem [shape: f32[8,1], index: 3, kind: input, shape index: {}]
  %s4 = inlined_call_operand.vmem [shape: f32[8,1], index: 4, kind: input, shape index: {}]
  %s5 = inlined_call_operand.vmem [shape: bf16[8,8], index: 5, kind: input, shape index: {}]
  %s6 = inlined_call_operand.vmem [shape: bf16[8,8], index: 6, kind: input, shape index: {}]
  %s7 = inlined_call_operand.vmem [shape: bf16[8,8], index: 7, kind: input, shape index: {}]
  %s8 = inlined_call_operand.vmem [shape: bf16[2,8,128], index: 8, kind: output, shape index: {0}]
  %s9 = inlined_call_operand.vmem [shape: f32[2,8,1], index: 9, kind: output, shape index: {1}]
  %s10 = inlined_call_operand.vmem [shape: f32[2,8,1], index: 10, kind: output, shape index: {2}]
  %11 = xla_tuple %s8, %s9, %s10
  %s12 = sld [smem:[#allocation0]]
  $region81: #{bottleneck1d_pallas.5} parent=0
    _
  %s14 = ssub.s32 1, %s12
  %s15 = scalar_select 0, %s14, %s12
  loop: start=0, step=1, limit=4
  $region2: #{bottleneck1d_pallas.5} parent=0 // loop_pre_header
    _
  $region3: #{bottleneck1d_pallas.5} parent=0 // loop_header
    %s17 = sphi 0, %s21
    %p18 = scmp.ge.s32.totalorder %s17, 4
    %s27 = sphi 0, %s29
    %s30 = sphi 0, %s27
    %s31 = sphi 0, %s30
    %s47 = sphi 0, %s31
    %s51 = sphi 0, %s51
    %s53 = sphi 0, %s51
    %s54 = sphi 0, %s53
    %s68 = sphi 0, %s54
    %s72 = sphi 0, %s72
    %s74 = sphi 0, %s72
    %s75 = sphi 0, %s74
    %s89 = sphi 0, %s75
    %s93 = sphi 0, %s93
    %s95 = sphi 0, %s93
    %s96 = sphi 0, %s95
    %s110 = sphi 0, %s96
    %s114 = sphi 0, %s114
    %s116 = sphi 0, %s114
    %s117 = sphi 0, %s116
    %s131 = sphi 0, %s117
    %s135 = sphi 0, %s135
    %s137 = sphi 0, %s135
    %s138 = sphi 0, %s137
    %s152 = sphi 0, %s138
    %s156 = sphi 0, %s156
    %s158 = sphi 0, %s156
    %s159 = sphi 0, %s158
    %s173 = sphi 0, %s159
    %s177 = sphi 0, %s177
    %s179 = sphi 0, %s177
    %s180 = sphi 0, %s179
    %s194 = sphi 0, %s180
    %s200 = sphi 0, %s202
    %s203 = sphi 0, %s200
    %s204 = sphi 0, %s203
    %s220 = sphi 0, %s204
    %s226 = sphi 0, %s228
    %s229 = sphi 0, %s226
    %s230 = sphi 0, %s229
    %s246 = sphi 0, %s230
    %s252 = sphi 0, %s254
    %s255 = sphi 0, %s252
    %s256 = sphi 0, %s255
    %s272 = sphi 0, %s256
  $region4: #{bottleneck1d_pallas.5} parent=0 // loop_header_branch
    %20 = sbr.rel (%p18) target = $region8
  $region5: #{bottleneck1d_pallas.5} parent=0 // loop_body
    %s22 = ssub.s32 %s17, 1
    %s23 = ssub.s32 %s17, 2
    %s24 = sadd.s32 %s17, 1
    %s25 = ssub.s32 %s17, %s24
    %p26 = scmp.eq.s32.totalorder %s25, 0
    %s28 = sadd.s32 %s27, 1
    %s29 = scalar_select %p26, %s27, %s28
    %p32 = pneg %p26
    %p33 = scmp.eq.s32.totalorder %s17, 1
    %p34 = por %p32, %p33
    %p35 = scmp.ne.s32.totalorder %s27, %s30
    %p36 = scmp.eq.s32.totalorder %s17, 0
    %p37 = por %p35, %p36
    %p38 = scmp.ne.s32.totalorder %s27, %s30
    %p39 = scmp.eq.s32.totalorder %s22, 1
    %p40 = por %p38, %p39
    %p41 = scmp.ne.s32.totalorder %s30, %s31
    %p42 = scmp.eq.s32.totalorder %s22, 0
    %p43 = por %p41, %p42
    %p44 = scmp.ne.s32.totalorder %s30, %s31
    %p45 = scmp.eq.s32.totalorder %s23, 1
    %p46 = por %p44, %p45
    %p48 = scmp.ne.s32.totalorder %s31, %s47
    %p49 = scmp.eq.s32.totalorder %s23, 0
    %p50 = por %p48, %p49
    %s52 = sadd.s32 %s51, 1
    %p55 = scmp.eq.s32.totalorder %s17, 1
    %p56 = scmp.ne.s32.totalorder %s51, %s53
    %p57 = scmp.eq.s32.totalorder %s17, 0
    %p58 = por %p56, %p57
    %p59 = scmp.ne.s32.totalorder %s51, %s53
    %p60 = scmp.eq.s32.totalorder %s22, 1
    %p61 = por %p59, %p60
    %p62 = scmp.ne.s32.totalorder %s53, %s54
    %p63 = scmp.eq.s32.totalorder %s22, 0
    %p64 = por %p62, %p63
    %p65 = scmp.ne.s32.totalorder %s53, %s54
    %p66 = scmp.eq.s32.totalorder %s23, 1
    %p67 = por %p65, %p66
    %p69 = scmp.ne.s32.totalorder %s54, %s68
    %p70 = scmp.eq.s32.totalorder %s23, 0
    %p71 = por %p69, %p70
    %s73 = sadd.s32 %s72, 1
    %p76 = scmp.eq.s32.totalorder %s17, 1
    %p77 = scmp.ne.s32.totalorder %s72, %s74
    %p78 = scmp.eq.s32.totalorder %s17, 0
    %p79 = por %p77, %p78
    %p80 = scmp.ne.s32.totalorder %s72, %s74
    %p81 = scmp.eq.s32.totalorder %s22, 1
    %p82 = por %p80, %p81
    %p83 = scmp.ne.s32.totalorder %s74, %s75
    %p84 = scmp.eq.s32.totalorder %s22, 0
    %p85 = por %p83, %p84
    %p86 = scmp.ne.s32.totalorder %s74, %s75
    %p87 = scmp.eq.s32.totalorder %s23, 1
    %p88 = por %p86, %p87
    %p90 = scmp.ne.s32.totalorder %s75, %s89
    %p91 = scmp.eq.s32.totalorder %s23, 0
    %p92 = por %p90, %p91
    %s94 = sadd.s32 %s93, 1
    %p97 = scmp.eq.s32.totalorder %s17, 1
    %p98 = scmp.ne.s32.totalorder %s93, %s95
    %p99 = scmp.eq.s32.totalorder %s17, 0
    %p100 = por %p98, %p99
    %p101 = scmp.ne.s32.totalorder %s93, %s95
    %p102 = scmp.eq.s32.totalorder %s22, 1
    %p103 = por %p101, %p102
    %p104 = scmp.ne.s32.totalorder %s95, %s96
    %p105 = scmp.eq.s32.totalorder %s22, 0
    %p106 = por %p104, %p105
    %p107 = scmp.ne.s32.totalorder %s95, %s96
    %p108 = scmp.eq.s32.totalorder %s23, 1
    %p109 = por %p107, %p108
    %p111 = scmp.ne.s32.totalorder %s96, %s110
    %p112 = scmp.eq.s32.totalorder %s23, 0
    %p113 = por %p111, %p112
    %s115 = sadd.s32 %s114, 1
    %p118 = scmp.eq.s32.totalorder %s17, 1
    %p119 = scmp.ne.s32.totalorder %s114, %s116
    %p120 = scmp.eq.s32.totalorder %s17, 0
    %p121 = por %p119, %p120
    %p122 = scmp.ne.s32.totalorder %s114, %s116
    %p123 = scmp.eq.s32.totalorder %s22, 1
    %p124 = por %p122, %p123
    %p125 = scmp.ne.s32.totalorder %s116, %s117
    %p126 = scmp.eq.s32.totalorder %s22, 0
    %p127 = por %p125, %p126
    %p128 = scmp.ne.s32.totalorder %s116, %s117
    %p129 = scmp.eq.s32.totalorder %s23, 1
    %p130 = por %p128, %p129
    %p132 = scmp.ne.s32.totalorder %s117, %s131
    %p133 = scmp.eq.s32.totalorder %s23, 0
    %p134 = por %p132, %p133
    %s136 = sadd.s32 %s135, 1
    %p139 = scmp.eq.s32.totalorder %s17, 1
    %p140 = scmp.ne.s32.totalorder %s135, %s137
    %p141 = scmp.eq.s32.totalorder %s17, 0
    %p142 = por %p140, %p141
    %p143 = scmp.ne.s32.totalorder %s135, %s137
    %p144 = scmp.eq.s32.totalorder %s22, 1
    %p145 = por %p143, %p144
    %p146 = scmp.ne.s32.totalorder %s137, %s138
    %p147 = scmp.eq.s32.totalorder %s22, 0
    %p148 = por %p146, %p147
    %p149 = scmp.ne.s32.totalorder %s137, %s138
    %p150 = scmp.eq.s32.totalorder %s23, 1
    %p151 = por %p149, %p150
    %p153 = scmp.ne.s32.totalorder %s138, %s152
    %p154 = scmp.eq.s32.totalorder %s23, 0
    %p155 = por %p153, %p154
    %s157 = sadd.s32 %s156, 1
    %p160 = scmp.eq.s32.totalorder %s17, 1
    %p161 = scmp.ne.s32.totalorder %s156, %s158
    %p162 = scmp.eq.s32.totalorder %s17, 0
    %p163 = por %p161, %p162
    %p164 = scmp.ne.s32.totalorder %s156, %s158
    %p165 = scmp.eq.s32.totalorder %s22, 1
    %p166 = por %p164, %p165
    %p167 = scmp.ne.s32.totalorder %s158, %s159
    %p168 = scmp.eq.s32.totalorder %s22, 0
    %p169 = por %p167, %p168
    %p170 = scmp.ne.s32.totalorder %s158, %s159
    %p171 = scmp.eq.s32.totalorder %s23, 1
    %p172 = por %p170, %p171
    %p174 = scmp.ne.s32.totalorder %s159, %s173
    %p175 = scmp.eq.s32.totalorder %s23, 0
    %p176 = por %p174, %p175
    %s178 = sadd.s32 %s177, 1
    %p181 = scmp.eq.s32.totalorder %s17, 1
    %p182 = scmp.ne.s32.totalorder %s177, %s179
    %p183 = scmp.eq.s32.totalorder %s17, 0
    %p184 = por %p182, %p183
    %p185 = scmp.ne.s32.totalorder %s177, %s179
    %p186 = scmp.eq.s32.totalorder %s22, 1
    %p187 = por %p185, %p186
    %p188 = scmp.ne.s32.totalorder %s179, %s180
    %p189 = scmp.eq.s32.totalorder %s22, 0
    %p190 = por %p188, %p189
    %p191 = scmp.ne.s32.totalorder %s179, %s180
    %p192 = scmp.eq.s32.totalorder %s23, 1
    %p193 = por %p191, %p192
    %p195 = scmp.ne.s32.totalorder %s180, %s194
    %p196 = scmp.eq.s32.totalorder %s23, 0
    %p197 = por %p195, %p196
    %s198 = ssub.s32 %s17, %s24
    %p199 = scmp.eq.s32.totalorder %s198, 0
    %s201 = sadd.s32 %s200, 1
    %s202 = scalar_select %p199, %s200, %s201
    %p205 = pneg %p199
    %p206 = scmp.eq.s32.totalorder %s17, 1
    %p207 = por %p205, %p206
    %p208 = scmp.ne.s32.totalorder %s200, %s203
    %p209 = scmp.eq.s32.totalorder %s17, 0
    %p210 = por %p208, %p209
    %p211 = scmp.ne.s32.totalorder %s200, %s203
    %p212 = scmp.eq.s32.totalorder %s22, 1
    %p213 = por %p211, %p212
    %p214 = scmp.ne.s32.totalorder %s203, %s204
    %p215 = scmp.eq.s32.totalorder %s22, 0
    %p216 = por %p214, %p215
    %p217 = scmp.ne.s32.totalorder %s203, %s204
    %p218 = scmp.eq.s32.totalorder %s23, 1
    %p219 = por %p217, %p218
    %p221 = scmp.ne.s32.totalorder %s204, %s220
    %p222 = scmp.eq.s32.totalorder %s23, 0
    %p223 = por %p221, %p222
    %s224 = ssub.s32 %s17, %s24
    %p225 = scmp.eq.s32.totalorder %s224, 0
    %s227 = sadd.s32 %s226, 1
    %s228 = scalar_select %p225, %s226, %s227
    %p231 = pneg %p225
    %p232 = scmp.eq.s32.totalorder %s17, 1
    %p233 = por %p231, %p232
    %p234 = scmp.ne.s32.totalorder %s226, %s229
    %p235 = scmp.eq.s32.totalorder %s17, 0
    %p236 = por %p234, %p235
    %p237 = scmp.ne.s32.totalorder %s226, %s229
    %p238 = scmp.eq.s32.totalorder %s22, 1
    %p239 = por %p237, %p238
    %p240 = scmp.ne.s32.totalorder %s229, %s230
    %p241 = scmp.eq.s32.totalorder %s22, 0
    %p242 = por %p240, %p241
    %p243 = scmp.ne.s32.totalorder %s229, %s230
    %p244 = scmp.eq.s32.totalorder %s23, 1
    %p245 = por %p243, %p244
    %p247 = scmp.ne.s32.totalorder %s230, %s246
    %p248 = scmp.eq.s32.totalorder %s23, 0
    %p249 = por %p247, %p248
    %s250 = ssub.s32 %s17, %s24
    %p251 = scmp.eq.s32.totalorder %s250, 0
    %s253 = sadd.s32 %s252, 1
    %s254 = scalar_select %p251, %s252, %s253
    %p257 = pneg %p251
    %p258 = scmp.eq.s32.totalorder %s17, 1
    %p259 = por %p257, %p258
    %p260 = scmp.ne.s32.totalorder %s252, %s255
    %p261 = scmp.eq.s32.totalorder %s17, 0
    %p262 = por %p260, %p261
    %p263 = scmp.ne.s32.totalorder %s252, %s255
    %p264 = scmp.eq.s32.totalorder %s22, 1
    %p265 = por %p263, %p264
    %p266 = scmp.ne.s32.totalorder %s255, %s256
    %p267 = scmp.eq.s32.totalorder %s22, 0
    %p268 = por %p266, %p267
    %p269 = scmp.ne.s32.totalorder %s255, %s256
    %p270 = scmp.eq.s32.totalorder %s23, 1
    %p271 = por %p269, %p270
    %p273 = scmp.ne.s32.totalorder %s256, %s272
    %p274 = scmp.eq.s32.totalorder %s23, 0
    %p275 = por %p273, %p274
    %p276 = scmp.le.s32.totalorder 1, %s17
    %p277 = scmp.lt.s32.totalorder %s17, 3
    %p278 = pnand %p276, %p277
    %p279 = pneg %p278
    // Predicated region
    $region9: #{bottleneck1d_pallas.5} parent=5 // pred_check
      _
    $region10: #{bottleneck1d_pallas.5} parent=5 // pred_check_branch
      %281 = sbr.rel (%p278) target = $region12
    $region11: #{bottleneck1d_pallas.5} parent=5 // pred_region
      %s282 = ssub.s32 %s17, 1
      // Predicated region
      $region13: #{bottleneck1d_pallas.5} parent=11 // pred_check
        %p283 = pneg %p64
      $region14: #{bottleneck1d_pallas.5} parent=11 // pred_check_branch
        %285 = sbr.rel (%p283) target = $region16
      $region15: #{bottleneck1d_pallas.5} parent=11 // pred_region
        _
      $region16: #{bottleneck1d_pallas.5} parent=11 // pred_fallthru
        _
      // Predicated region
      $region17: #{bottleneck1d_pallas.5} parent=11 // pred_check
        %p286 = pneg %p85
      $region18: #{bottleneck1d_pallas.5} parent=11 // pred_check_branch
        %288 = sbr.rel (%p286) target = $region20
      $region19: #{bottleneck1d_pallas.5} parent=11 // pred_region
        _
      $region20: #{bottleneck1d_pallas.5} parent=11 // pred_fallthru
        _
      // Predicated region
      $region21: #{bottleneck1d_pallas.5} parent=11 // pred_check
        %p289 = pneg %p106
      $region22: #{bottleneck1d_pallas.5} parent=11 // pred_check_branch
        %291 = sbr.rel (%p289) target = $region24
      $region23: #{bottleneck1d_pallas.5} parent=11 // pred_region
        _
      $region24: #{bottleneck1d_pallas.5} parent=11 // pred_fallthru
        _
      // Predicated region
      $region25: #{bottleneck1d_pallas.5} parent=11 // pred_check
        %p292 = pneg %p127
      $region26: #{bottleneck1d_pallas.5} parent=11 // pred_check_branch
        %294 = sbr.rel (%p292) target = $region28
      $region27: #{bottleneck1d_pallas.5} parent=11 // pred_region
        _
      $region28: #{bottleneck1d_pallas.5} parent=11 // pred_fallthru
        _
      // Predicated region
      $region29: #{bottleneck1d_pallas.5} parent=11 // pred_check
        %p295 = pneg %p148
      $region30: #{bottleneck1d_pallas.5} parent=11 // pred_check_branch
        %297 = sbr.rel (%p295) target = $region32
      $region31: #{bottleneck1d_pallas.5} parent=11 // pred_region
        _
      $region32: #{bottleneck1d_pallas.5} parent=11 // pred_fallthru
        _
      // Predicated region
      $region33: #{bottleneck1d_pallas.5} parent=11 // pred_check
        %p298 = pneg %p169
      $region34: #{bottleneck1d_pallas.5} parent=11 // pred_check_branch
        %300 = sbr.rel (%p298) target = $region36
      $region35: #{bottleneck1d_pallas.5} parent=11 // pred_region
        _
      $region36: #{bottleneck1d_pallas.5} parent=11 // pred_fallthru
        _
      // Predicated region
      $region37: #{bottleneck1d_pallas.5} parent=11 // pred_check
        %p301 = pneg %p190
      $region38: #{bottleneck1d_pallas.5} parent=11 // pred_check_branch
        %303 = sbr.rel (%p301) target = $region40
      $region39: #{bottleneck1d_pallas.5} parent=11 // pred_region
        _
      $region40: #{bottleneck1d_pallas.5} parent=11 // pred_fallthru
        _
    $region12: #{bottleneck1d_pallas.5} parent=5 // pred_fallthru
      _
    %p304 = scmp.lt.s32.totalorder %s17, 2
    // Predicated region
    $region41: #{bottleneck1d_pallas.5} parent=5 // pred_check
      %p305 = pneg %p304
    $region42: #{bottleneck1d_pallas.5} parent=5 // pred_check_branch
      %307 = sbr.rel (%p305) target = $region44
    $region43: #{bottleneck1d_pallas.5} parent=5 // pred_region
      // Predicated region
      $region45: #{bottleneck1d_pallas.5} parent=43 // pred_check
        %p308 = pneg %p37
      $region46: #{bottleneck1d_pallas.5} parent=43 // pred_check_branch
        %310 = sbr.rel (%p308) target = $region48
      $region47: #{bottleneck1d_pallas.5} parent=43 // pred_region
        %p311 = scmp.lt.s32.totalorder %s17, 1
        %s312 = scalar_select %p311, %s17, 1
        %s313 = smul.addr %s312, 4
        %s314 = scalar_lea.vmem %s0, %s313
      $region48: #{bottleneck1d_pallas.5} parent=43 // pred_fallthru
        _
    $region44: #{bottleneck1d_pallas.5} parent=5 // pred_fallthru
      _
    %p315 = scmp.le.s32.totalorder 1, %s17
    %p316 = scmp.lt.s32.totalorder %s17, 3
    %p317 = pnand %p315, %p316
    %p318 = pneg %p317
    // Predicated region
    $region49: #{bottleneck1d_pallas.5} parent=5 // pred_check
      _
    $region50: #{bottleneck1d_pallas.5} parent=5 // pred_check_branch
      %320 = sbr.rel (%p317) target = $region52
    $region51: #{bottleneck1d_pallas.5} parent=5 // pred_region
      %s321 = ssub.s32 %s17, 1
      %p322 = scmp.lt.s32.totalorder %s22, 1
      %s323 = scalar_select %p322, %s22, 1
      %s324 = smul.addr %s323, 4
      %s325 = scalar_lea.vmem %s0, %s324
      %p326 = pneg %p43
      %p327 = pneg %p40
      %p328 = pneg %p64
      %p329 = pneg %p61
      %p330 = pneg %p85
      %p331 = pneg %p82
      %p332 = pneg %p106
      %p333 = pneg %p103
      %p334 = pneg %p127
      %p335 = pneg %p124
      %p336 = pneg %p148
      %p337 = pneg %p145
      %p338 = pneg %p169
      %p339 = pneg %p166
      %p340 = pneg %p190
      %p341 = pneg %p187
      %p342 = pneg %p216
      %p343 = pneg %p213
      %p344 = scmp.lt.s32.totalorder %s22, 1
      %s345 = scalar_select %p344, %s22, 1
      %s346 = smul.addr %s345, 4
      %s347 = scalar_lea.vmem %s8, %s346
      %p348 = pneg %p242
      %p349 = pneg %p239
      %p350 = scmp.lt.s32.totalorder %s22, 1
      %s351 = scalar_select %p350, %s22, 1
      %s352 = smul.addr %s351, 8
      %s353 = scalar_lea.vmem %s9, %s352
      %p354 = pneg %p268
      %p355 = pneg %p265
      %p356 = scmp.lt.s32.totalorder %s22, 1
      %s357 = scalar_select %p356, %s22, 1
      %s358 = smul.addr %s357, 8
      %s359 = scalar_lea.vmem %s10, %s358
      %p360 = scmp.lt.s32.totalorder %s22, 1
      %s361 = scalar_select %p360, %s22, 1
      %s362 = smul.addr %s361, 4
      %s363 = scalar_lea.vmem %s0, %s362
      %p364 = scmp.lt.s32.totalorder %s22, 1
      %s365 = scalar_select %p364, %s22, 1
      %s366 = smul.addr %s365, 4
      %s367 = scalar_lea.vmem %s8, %s366
      %p368 = scmp.lt.s32.totalorder %s22, 1
      %s369 = scalar_select %p368, %s22, 1
      %s370 = smul.addr %s369, 8
      %s371 = scalar_lea.vmem %s9, %s370
      %p372 = scmp.lt.s32.totalorder %s22, 1
      %s373 = scalar_select %p372, %s22, 1
      %s374 = smul.addr %s373, 8
      %s375 = scalar_lea.vmem %s10, %s374
      %v377 = vld [vmem:[%s1] sm:$0xff]
      %v378 = vld [vmem:[%s1 + $0x8] sm:$0xff]
      %vm379 = vcmask 7168
      %v380 = vsel %vm379, %v377, 0.0
      %v381 = vsel %vm379, %v378, 0.0
      %v382 = vadd.f32 %v380, %v381
      %v383 = vmul.f32 %v382, 0.00390625
      %v384 = vld [vmem:[%s2] sm:$0xff]
      %v385 = vld [vmem:[%s2 + $0x8] sm:$0xff]
      %v386 = vsel %vm379, %v384, 0.0
      %v387 = vsel %vm379, %v385, 0.0
      %v388 = vadd.f32 %v386, %v387
      %v389 = vmul.f32 %v388, 0.00390625
      %v390 = vmul.f32 %v383, %v383
      %v391 = vsub.f32 %v389, %v390
      %v392 = vmax.f32 %v391, 0.0
      %v393 = vld [vmem:[%s3] sm:$0xff]
      %v394 = vadd.f32 %v392, 1e-05
      %v395 = vrsqrt.pop %v394
      %v396 = vmul.f32 %v395, %v394
      %v397 = vmul.f32 %v396, %v395
      %v398 = vmul.f32 0.5, %v397
      %v399 = vsub.f32 1.5, %v398
      %v400 = vmul.f32 %v395, %v399
      %vm401 = vweird.f32 %v394
      %vm402 = vweird.f32 %v395
      %vm403 = vmor %vm401, %vm402
      %v404 = vsel %vm403, %v395, %v400
      %v405 = vmul.f32 %v393, %v404
      %v406 = vld [vmem:[%s4] sm:$0xff]
      %v407 = vmul.f32 %v383, %v405
      %v408 = vsub.f32 %v406, %v407
      %v409 = vld [vmem:[%s5] sm:$0xf]
      %v410 = vld [vmem:[%s6] sm:$0xf]
      %v411 = vld [vmem:[%s7] sm:$0xf]
      %v412 = vlaneseq
      %v413 = vand.u32 %v412, 127
      %v414 = vld [vmem:[%s363] sm:$0xf]
      %v415 = vunpack.c.l.bf16 %v414
      %417 = vset.pattern.permute.xlu0 0
      %418 = vperm.xlu0 %417, %v405
      %v419 = vpop.permute.xlu0 %418
      %v421 = vmul.f32 %v415, %v419
      %423 = vset.pattern.permute.xlu0 0
      %424 = vperm.xlu0 %423, %v408
      %v425 = vpop.permute.xlu0 %424
      %v427 = vadd.f32 %v421, %v425
      %v428 = vmax.f32 %v427, 0.0
      %vm429 = vcmp.eq.s32.totalorder %v413, 0
      %430 = vrot.lane.b32.xlu0 %v428, 1
      %v431 = vpop.permute.xlu0 %430
      %v432 = vsel %vm429, 0.0, %v431
      %vm433 = vcmp.eq.s32.totalorder %v413, 127
      %434 = vrot.lane.b32.xlu0 %v428, 127
      %v435 = vpop.permute.xlu0 %434
      %v436 = vsel %vm433, 0.0, %v435
      %v437 = vpack.c.bf16 %v428, %v428
      %v438 = vpack.c.bf16 %v432, %v432
      %vm439 = vcmask 64512
      %v441 = vsel %vm439, %v409, 0
      %vm443 = vcmask 1043456
      %v445 = vsel %vm443, %v438, 0
      %447 = vmatpush.bf16.msra.mxu0 0
      %448 = vmatpush.bf16.msra.mxu0 0
      %449 = vmatpush.bf16.msra.mxu0 0
      %450 = vmatpush.bf16.msra.mxu0 0
      %451 = vmatpush.bf16.msra.mxu0 0
      %452 = vmatpush.bf16.msra.mxu0 0
      %453 = vmatpush.bf16.msra.mxu0 0
      %454 = vmatpush.bf16.msra.mxu0 %v445
      %455 = vmatmul.bf16.gmra.mxu0 %v441
      %v456 = vpop.f32.mrf.mxu0
      %v457 = vadd.f32 0.0, %v456
      %v458 = vpop.f32.mrf.mxu0
      %459 = vdwg.mxu0
      %v461 = vsel %vm439, %v410, 0
      %v464 = vsel %vm443, %v437, 0
      %466 = vmatpush.bf16.msra.mxu0 0
      %467 = vmatpush.bf16.msra.mxu0 0
      %468 = vmatpush.bf16.msra.mxu0 0
      %469 = vmatpush.bf16.msra.mxu0 0
      %470 = vmatpush.bf16.msra.mxu0 0
      %471 = vmatpush.bf16.msra.mxu0 0
      %472 = vmatpush.bf16.msra.mxu0 0
      %473 = vmatpush.bf16.msra.mxu0 %v464
      %474 = vmatmul.bf16.gmra.mxu0 %v461
      %v475 = vpop.f32.mrf.mxu0
      %v476 = vadd.f32 %v457, %v475
      %v477 = vpop.f32.mrf.mxu0
      %478 = vdwg.mxu0
      %v479 = vpack.c.bf16 %v436, %v436
      %v481 = vsel %vm439, %v411, 0
      %v484 = vsel %vm443, %v479, 0
      %486 = vmatpush.bf16.msra.mxu0 0
      %487 = vmatpush.bf16.msra.mxu0 0
      %488 = vmatpush.bf16.msra.mxu0 0
      %489 = vmatpush.bf16.msra.mxu0 0
      %490 = vmatpush.bf16.msra.mxu0 0
      %491 = vmatpush.bf16.msra.mxu0 0
      %492 = vmatpush.bf16.msra.mxu0 0
      %493 = vmatpush.bf16.msra.mxu0 %v484
      %494 = vmatmul.bf16.gmra.mxu0 %v481
      %v495 = vpop.f32.mrf.mxu0
      %v496 = vadd.f32 0.0, %v495
      %v497 = vpop.f32.mrf.mxu0
      %498 = vdwg.mxu0
      %v499 = vadd.f32 %v476, %v496
      %v500 = vpack.c.bf16 %v499, %v499
      %501 = vst [vmem:[%s367] sm:$0xf] %v500
      %v502 = vunpack.c.l.bf16 %v500
      %503 = vadd.xlane.f32.xlu0 %v502
      %v504 = vpop.xlane.xlu0 %503
      %v505 = vadd.f32 %v504, 0.0
      %v506 = vmul.f32 %v502, %v502
      %507 = vadd.xlane.f32.xlu0 %v506
      %v508 = vpop.xlane.xlu0 %507
      %v509 = vadd.f32 %v508, 0.0
      %510 = vst.msk [vmem:[%s371] sm:$0xff] %vm379, %v505
      %511 = vst.msk [vmem:[%s375] sm:$0xff] %vm379, %v509
      %p512 = scmp.lt.s32.totalorder %s22, 1
      %s513 = scalar_select %p512, %s22, 1
      %s514 = smul.addr %s513, 4
      %s515 = scalar_lea.vmem %s8, %s514
      %p516 = scmp.lt.s32.totalorder %s22, 1
      %s517 = scalar_select %p516, %s22, 1
      %s518 = smul.addr %s517, 8
      %s519 = scalar_lea.vmem %s9, %s518
      %p520 = scmp.lt.s32.totalorder %s22, 1
      %s521 = scalar_select %p520, %s22, 1
      %s522 = smul.addr %s521, 8
      %s523 = scalar_lea.vmem %s10, %s522
      // Predicated region
      $region53: #{bottleneck1d_pallas.5} parent=51 // pred_check
        %p524 = pneg %p213
      $region54: #{bottleneck1d_pallas.5} parent=51 // pred_check_branch
        %526 = sbr.rel (%p524) target = $region56
      $region55: #{bottleneck1d_pallas.5} parent=51 // pred_region
        _
      $region56: #{bottleneck1d_pallas.5} parent=51 // pred_fallthru
        _
      // Predicated region
      $region57: #{bottleneck1d_pallas.5} parent=51 // pred_check
        %p527 = pneg %p239
      $region58: #{bottleneck1d_pallas.5} parent=51 // pred_check_branch
        %529 = sbr.rel (%p527) target = $region60
      $region59: #{bottleneck1d_pallas.5} parent=51 // pred_region
        _
      $region60: #{bottleneck1d_pallas.5} parent=51 // pred_fallthru
        _
      // Predicated region
      $region61: #{bottleneck1d_pallas.5} parent=51 // pred_check
        %p530 = pneg %p265
      $region62: #{bottleneck1d_pallas.5} parent=51 // pred_check_branch
        %532 = sbr.rel (%p530) target = $region64
      $region63: #{bottleneck1d_pallas.5} parent=51 // pred_region
        _
      $region64: #{bottleneck1d_pallas.5} parent=51 // pred_fallthru
        _
    $region52: #{bottleneck1d_pallas.5} parent=5 // pred_fallthru
      _
    %p533 = scmp.le.s32.totalorder 2, %s17
    // Predicated region
    $region65: #{bottleneck1d_pallas.5} parent=5 // pred_check
      %p534 = pneg %p533
    $region66: #{bottleneck1d_pallas.5} parent=5 // pred_check_branch
      %536 = sbr.rel (%p534) target = $region68
    $region67: #{bottleneck1d_pallas.5} parent=5 // pred_region
      %s537 = ssub.s32 %s17, 2
      // Predicated region
      $region69: #{bottleneck1d_pallas.5} parent=67 // pred_check
        %p538 = pneg %p219
      $region70: #{bottleneck1d_pallas.5} parent=67 // pred_check_branch
        %540 = sbr.rel (%p538) target = $region72
      $region71: #{bottleneck1d_pallas.5} parent=67 // pred_region
        %p541 = scmp.lt.s32.totalorder %s23, 1
        %s542 = scalar_select %p541, %s23, 1
        %s543 = smul.addr %s542, 4
        %s544 = scalar_lea.vmem %s8, %s543
      $region72: #{bottleneck1d_pallas.5} parent=67 // pred_fallthru
        _
      // Predicated region
      $region73: #{bottleneck1d_pallas.5} parent=67 // pred_check
        %p545 = pneg %p245
      $region74: #{bottleneck1d_pallas.5} parent=67 // pred_check_branch
        %547 = sbr.rel (%p545) target = $region76
      $region75: #{bottleneck1d_pallas.5} parent=67 // pred_region
        %p548 = scmp.lt.s32.totalorder %s23, 1
        %s549 = scalar_select %p548, %s23, 1
        %s550 = smul.addr %s549, 8
        %s551 = scalar_lea.vmem %s9, %s550
      $region76: #{bottleneck1d_pallas.5} parent=67 // pred_fallthru
        _
      // Predicated region
      $region77: #{bottleneck1d_pallas.5} parent=67 // pred_check
        %p552 = pneg %p271
      $region78: #{bottleneck1d_pallas.5} parent=67 // pred_check_branch
        %554 = sbr.rel (%p552) target = $region80
      $region79: #{bottleneck1d_pallas.5} parent=67 // pred_region
        %p555 = scmp.lt.s32.totalorder %s23, 1
        %s556 = scalar_select %p555, %s23, 1
        %s557 = smul.addr %s556, 8
        %s558 = scalar_lea.vmem %s10, %s557
      $region80: #{bottleneck1d_pallas.5} parent=67 // pred_fallthru
        _
    $region68: #{bottleneck1d_pallas.5} parent=5 // pred_fallthru
      _
  $region6: #{bottleneck1d_pallas.5} parent=0 // loop_footer
    %s21 = sadd.s32 1, %s17
  $region7: #{bottleneck1d_pallas.5} parent=0 // loop_footer_branch
    %16 = sbr.rel target = $region3
  $region8: #{bottleneck1d_pallas.5} parent=0 // loop_exit
    _

// kernel: bottleneck1d_pallas.6
$region0: #{bottleneck1d_pallas.6}
  #allocation0 [shape = 'u32[]', space=smem, size = 0x4, offset = 0x4, fixed_abs, tag = 'smem constant byte address 0x4 - core index']
  #allocation1 [shape = 'u32[72,128]{1,0:T(1,128)}', space=vmem, size = 0x9000, scoped, tag = 'internal scratch']
  %s0 = inlined_call_operand.vmem [shape: bf16[2,8,128], index: 0, kind: input, shape index: {}]
  %s1 = inlined_call_operand.vmem [shape: f32[2,8,1], index: 1, kind: input, shape index: {}]
  %s2 = inlined_call_operand.vmem [shape: f32[2,8,1], index: 2, kind: input, shape index: {}]
  %s3 = inlined_call_operand.vmem [shape: f32[8,1], index: 3, kind: input, shape index: {}]
  %s4 = inlined_call_operand.vmem [shape: f32[8,1], index: 4, kind: input, shape index: {}]
  %s5 = inlined_call_operand.vmem [shape: bf16[32,8], index: 5, kind: input, shape index: {}]
  %s6 = inlined_call_operand.vmem [shape: f32[2,32,1], index: 6, kind: output, shape index: {0}]
  %s7 = inlined_call_operand.vmem [shape: f32[2,32,1], index: 7, kind: output, shape index: {1}]
  %8 = xla_tuple %s6, %s7
  %s9 = sld [smem:[#allocation0]]
  $region65: #{bottleneck1d_pallas.6} parent=0
    _
  %s11 = ssub.s32 1, %s9
  %s12 = scalar_select 0, %s11, %s9
  loop: start=0, step=1, limit=4
  $region2: #{bottleneck1d_pallas.6} parent=0 // loop_pre_header
    _
  $region3: #{bottleneck1d_pallas.6} parent=0 // loop_header
    %s14 = sphi 0, %s18
    %p15 = scmp.ge.s32.totalorder %s14, 4
    %s24 = sphi 0, %s26
    %s27 = sphi 0, %s24
    %s28 = sphi 0, %s27
    %s44 = sphi 0, %s28
    %s48 = sphi 0, %s48
    %s50 = sphi 0, %s48
    %s51 = sphi 0, %s50
    %s65 = sphi 0, %s51
    %s69 = sphi 0, %s69
    %s71 = sphi 0, %s69
    %s72 = sphi 0, %s71
    %s86 = sphi 0, %s72
    %s90 = sphi 0, %s90
    %s92 = sphi 0, %s90
    %s93 = sphi 0, %s92
    %s107 = sphi 0, %s93
    %s111 = sphi 0, %s111
    %s113 = sphi 0, %s111
    %s114 = sphi 0, %s113
    %s128 = sphi 0, %s114
    %s132 = sphi 0, %s132
    %s134 = sphi 0, %s132
    %s135 = sphi 0, %s134
    %s149 = sphi 0, %s135
    %s155 = sphi 0, %s157
    %s158 = sphi 0, %s155
    %s159 = sphi 0, %s158
    %s175 = sphi 0, %s159
    %s181 = sphi 0, %s183
    %s184 = sphi 0, %s181
    %s185 = sphi 0, %s184
    %s201 = sphi 0, %s185
  $region4: #{bottleneck1d_pallas.6} parent=0 // loop_header_branch
    %17 = sbr.rel (%p15) target = $region8
  $region5: #{bottleneck1d_pallas.6} parent=0 // loop_body
    %s19 = ssub.s32 %s14, 1
    %s20 = ssub.s32 %s14, 2
    %s21 = sadd.s32 %s14, 1
    %s22 = ssub.s32 %s14, %s21
    %p23 = scmp.eq.s32.totalorder %s22, 0
    %s25 = sadd.s32 %s24, 1
    %s26 = scalar_select %p23, %s24, %s25
    %p29 = pneg %p23
    %p30 = scmp.eq.s32.totalorder %s14, 1
    %p31 = por %p29, %p30
    %p32 = scmp.ne.s32.totalorder %s24, %s27
    %p33 = scmp.eq.s32.totalorder %s14, 0
    %p34 = por %p32, %p33
    %p35 = scmp.ne.s32.totalorder %s24, %s27
    %p36 = scmp.eq.s32.totalorder %s19, 1
    %p37 = por %p35, %p36
    %p38 = scmp.ne.s32.totalorder %s27, %s28
    %p39 = scmp.eq.s32.totalorder %s19, 0
    %p40 = por %p38, %p39
    %p41 = scmp.ne.s32.totalorder %s27, %s28
    %p42 = scmp.eq.s32.totalorder %s20, 1
    %p43 = por %p41, %p42
    %p45 = scmp.ne.s32.totalorder %s28, %s44
    %p46 = scmp.eq.s32.totalorder %s20, 0
    %p47 = por %p45, %p46
    %s49 = sadd.s32 %s48, 1
    %p52 = scmp.eq.s32.totalorder %s14, 1
    %p53 = scmp.ne.s32.totalorder %s48, %s50
    %p54 = scmp.eq.s32.totalorder %s14, 0
    %p55 = por %p53, %p54
    %p56 = scmp.ne.s32.totalorder %s48, %s50
    %p57 = scmp.eq.s32.totalorder %s19, 1
    %p58 = por %p56, %p57
    %p59 = scmp.ne.s32.totalorder %s50, %s51
    %p60 = scmp.eq.s32.totalorder %s19, 0
    %p61 = por %p59, %p60
    %p62 = scmp.ne.s32.totalorder %s50, %s51
    %p63 = scmp.eq.s32.totalorder %s20, 1
    %p64 = por %p62, %p63
    %p66 = scmp.ne.s32.totalorder %s51, %s65
    %p67 = scmp.eq.s32.totalorder %s20, 0
    %p68 = por %p66, %p67
    %s70 = sadd.s32 %s69, 1
    %p73 = scmp.eq.s32.totalorder %s14, 1
    %p74 = scmp.ne.s32.totalorder %s69, %s71
    %p75 = scmp.eq.s32.totalorder %s14, 0
    %p76 = por %p74, %p75
    %p77 = scmp.ne.s32.totalorder %s69, %s71
    %p78 = scmp.eq.s32.totalorder %s19, 1
    %p79 = por %p77, %p78
    %p80 = scmp.ne.s32.totalorder %s71, %s72
    %p81 = scmp.eq.s32.totalorder %s19, 0
    %p82 = por %p80, %p81
    %p83 = scmp.ne.s32.totalorder %s71, %s72
    %p84 = scmp.eq.s32.totalorder %s20, 1
    %p85 = por %p83, %p84
    %p87 = scmp.ne.s32.totalorder %s72, %s86
    %p88 = scmp.eq.s32.totalorder %s20, 0
    %p89 = por %p87, %p88
    %s91 = sadd.s32 %s90, 1
    %p94 = scmp.eq.s32.totalorder %s14, 1
    %p95 = scmp.ne.s32.totalorder %s90, %s92
    %p96 = scmp.eq.s32.totalorder %s14, 0
    %p97 = por %p95, %p96
    %p98 = scmp.ne.s32.totalorder %s90, %s92
    %p99 = scmp.eq.s32.totalorder %s19, 1
    %p100 = por %p98, %p99
    %p101 = scmp.ne.s32.totalorder %s92, %s93
    %p102 = scmp.eq.s32.totalorder %s19, 0
    %p103 = por %p101, %p102
    %p104 = scmp.ne.s32.totalorder %s92, %s93
    %p105 = scmp.eq.s32.totalorder %s20, 1
    %p106 = por %p104, %p105
    %p108 = scmp.ne.s32.totalorder %s93, %s107
    %p109 = scmp.eq.s32.totalorder %s20, 0
    %p110 = por %p108, %p109
    %s112 = sadd.s32 %s111, 1
    %p115 = scmp.eq.s32.totalorder %s14, 1
    %p116 = scmp.ne.s32.totalorder %s111, %s113
    %p117 = scmp.eq.s32.totalorder %s14, 0
    %p118 = por %p116, %p117
    %p119 = scmp.ne.s32.totalorder %s111, %s113
    %p120 = scmp.eq.s32.totalorder %s19, 1
    %p121 = por %p119, %p120
    %p122 = scmp.ne.s32.totalorder %s113, %s114
    %p123 = scmp.eq.s32.totalorder %s19, 0
    %p124 = por %p122, %p123
    %p125 = scmp.ne.s32.totalorder %s113, %s114
    %p126 = scmp.eq.s32.totalorder %s20, 1
    %p127 = por %p125, %p126
    %p129 = scmp.ne.s32.totalorder %s114, %s128
    %p130 = scmp.eq.s32.totalorder %s20, 0
    %p131 = por %p129, %p130
    %s133 = sadd.s32 %s132, 1
    %p136 = scmp.eq.s32.totalorder %s14, 1
    %p137 = scmp.ne.s32.totalorder %s132, %s134
    %p138 = scmp.eq.s32.totalorder %s14, 0
    %p139 = por %p137, %p138
    %p140 = scmp.ne.s32.totalorder %s132, %s134
    %p141 = scmp.eq.s32.totalorder %s19, 1
    %p142 = por %p140, %p141
    %p143 = scmp.ne.s32.totalorder %s134, %s135
    %p144 = scmp.eq.s32.totalorder %s19, 0
    %p145 = por %p143, %p144
    %p146 = scmp.ne.s32.totalorder %s134, %s135
    %p147 = scmp.eq.s32.totalorder %s20, 1
    %p148 = por %p146, %p147
    %p150 = scmp.ne.s32.totalorder %s135, %s149
    %p151 = scmp.eq.s32.totalorder %s20, 0
    %p152 = por %p150, %p151
    %s153 = ssub.s32 %s14, %s21
    %p154 = scmp.eq.s32.totalorder %s153, 0
    %s156 = sadd.s32 %s155, 1
    %s157 = scalar_select %p154, %s155, %s156
    %p160 = pneg %p154
    %p161 = scmp.eq.s32.totalorder %s14, 1
    %p162 = por %p160, %p161
    %p163 = scmp.ne.s32.totalorder %s155, %s158
    %p164 = scmp.eq.s32.totalorder %s14, 0
    %p165 = por %p163, %p164
    %p166 = scmp.ne.s32.totalorder %s155, %s158
    %p167 = scmp.eq.s32.totalorder %s19, 1
    %p168 = por %p166, %p167
    %p169 = scmp.ne.s32.totalorder %s158, %s159
    %p170 = scmp.eq.s32.totalorder %s19, 0
    %p171 = por %p169, %p170
    %p172 = scmp.ne.s32.totalorder %s158, %s159
    %p173 = scmp.eq.s32.totalorder %s20, 1
    %p174 = por %p172, %p173
    %p176 = scmp.ne.s32.totalorder %s159, %s175
    %p177 = scmp.eq.s32.totalorder %s20, 0
    %p178 = por %p176, %p177
    %s179 = ssub.s32 %s14, %s21
    %p180 = scmp.eq.s32.totalorder %s179, 0
    %s182 = sadd.s32 %s181, 1
    %s183 = scalar_select %p180, %s181, %s182
    %p186 = pneg %p180
    %p187 = scmp.eq.s32.totalorder %s14, 1
    %p188 = por %p186, %p187
    %p189 = scmp.ne.s32.totalorder %s181, %s184
    %p190 = scmp.eq.s32.totalorder %s14, 0
    %p191 = por %p189, %p190
    %p192 = scmp.ne.s32.totalorder %s181, %s184
    %p193 = scmp.eq.s32.totalorder %s19, 1
    %p194 = por %p192, %p193
    %p195 = scmp.ne.s32.totalorder %s184, %s185
    %p196 = scmp.eq.s32.totalorder %s19, 0
    %p197 = por %p195, %p196
    %p198 = scmp.ne.s32.totalorder %s184, %s185
    %p199 = scmp.eq.s32.totalorder %s20, 1
    %p200 = por %p198, %p199
    %p202 = scmp.ne.s32.totalorder %s185, %s201
    %p203 = scmp.eq.s32.totalorder %s20, 0
    %p204 = por %p202, %p203
    %p205 = scmp.le.s32.totalorder 1, %s14
    %p206 = scmp.lt.s32.totalorder %s14, 3
    %p207 = pnand %p205, %p206
    %p208 = pneg %p207
    // Predicated region
    $region9: #{bottleneck1d_pallas.6} parent=5 // pred_check
      _
    $region10: #{bottleneck1d_pallas.6} parent=5 // pred_check_branch
      %210 = sbr.rel (%p207) target = $region12
    $region11: #{bottleneck1d_pallas.6} parent=5 // pred_region
      %s211 = ssub.s32 %s14, 1
      // Predicated region
      $region13: #{bottleneck1d_pallas.6} parent=11 // pred_check
        %p212 = pneg %p61
      $region14: #{bottleneck1d_pallas.6} parent=11 // pred_check_branch
        %214 = sbr.rel (%p212) target = $region16
      $region15: #{bottleneck1d_pallas.6} parent=11 // pred_region
        _
      $region16: #{bottleneck1d_pallas.6} parent=11 // pred_fallthru
        _
      // Predicated region
      $region17: #{bottleneck1d_pallas.6} parent=11 // pred_check
        %p215 = pneg %p82
      $region18: #{bottleneck1d_pallas.6} parent=11 // pred_check_branch
        %217 = sbr.rel (%p215) target = $region20
      $region19: #{bottleneck1d_pallas.6} parent=11 // pred_region
        _
      $region20: #{bottleneck1d_pallas.6} parent=11 // pred_fallthru
        _
      // Predicated region
      $region21: #{bottleneck1d_pallas.6} parent=11 // pred_check
        %p218 = pneg %p103
      $region22: #{bottleneck1d_pallas.6} parent=11 // pred_check_branch
        %220 = sbr.rel (%p218) target = $region24
      $region23: #{bottleneck1d_pallas.6} parent=11 // pred_region
        _
      $region24: #{bottleneck1d_pallas.6} parent=11 // pred_fallthru
        _
      // Predicated region
      $region25: #{bottleneck1d_pallas.6} parent=11 // pred_check
        %p221 = pneg %p124
      $region26: #{bottleneck1d_pallas.6} parent=11 // pred_check_branch
        %223 = sbr.rel (%p221) target = $region28
      $region27: #{bottleneck1d_pallas.6} parent=11 // pred_region
        _
      $region28: #{bottleneck1d_pallas.6} parent=11 // pred_fallthru
        _
      // Predicated region
      $region29: #{bottleneck1d_pallas.6} parent=11 // pred_check
        %p224 = pneg %p145
      $region30: #{bottleneck1d_pallas.6} parent=11 // pred_check_branch
        %226 = sbr.rel (%p224) target = $region32
      $region31: #{bottleneck1d_pallas.6} parent=11 // pred_region
        _
      $region32: #{bottleneck1d_pallas.6} parent=11 // pred_fallthru
        _
    $region12: #{bottleneck1d_pallas.6} parent=5 // pred_fallthru
      _
    %p227 = scmp.lt.s32.totalorder %s14, 2
    // Predicated region
    $region33: #{bottleneck1d_pallas.6} parent=5 // pred_check
      %p228 = pneg %p227
    $region34: #{bottleneck1d_pallas.6} parent=5 // pred_check_branch
      %230 = sbr.rel (%p228) target = $region36
    $region35: #{bottleneck1d_pallas.6} parent=5 // pred_region
      // Predicated region
      $region37: #{bottleneck1d_pallas.6} parent=35 // pred_check
        %p231 = pneg %p34
      $region38: #{bottleneck1d_pallas.6} parent=35 // pred_check_branch
        %233 = sbr.rel (%p231) target = $region40
      $region39: #{bottleneck1d_pallas.6} parent=35 // pred_region
        %p234 = scmp.lt.s32.totalorder %s14, 1
        %s235 = scalar_select %p234, %s14, 1
        %s236 = smul.addr %s235, 4
        %s237 = scalar_lea.vmem %s0, %s236
      $region40: #{bottleneck1d_pallas.6} parent=35 // pred_fallthru
        _
    $region36: #{bottleneck1d_pallas.6} parent=5 // pred_fallthru
      _
    %p238 = scmp.le.s32.totalorder 1, %s14
    %p239 = scmp.lt.s32.totalorder %s14, 3
    %p240 = pnand %p238, %p239
    %p241 = pneg %p240
    // Predicated region
    $region41: #{bottleneck1d_pallas.6} parent=5 // pred_check
      _
    $region42: #{bottleneck1d_pallas.6} parent=5 // pred_check_branch
      %243 = sbr.rel (%p240) target = $region44
    $region43: #{bottleneck1d_pallas.6} parent=5 // pred_region
      %s244 = ssub.s32 %s14, 1
      %p245 = scmp.lt.s32.totalorder %s19, 1
      %s246 = scalar_select %p245, %s19, 1
      %s247 = smul.addr %s246, 4
      %s248 = scalar_lea.vmem %s0, %s247
      %p249 = pneg %p40
      %p250 = pneg %p37
      %p251 = pneg %p61
      %p252 = pneg %p58
      %p253 = pneg %p82
      %p254 = pneg %p79
      %p255 = pneg %p103
      %p256 = pneg %p100
      %p257 = pneg %p124
      %p258 = pneg %p121
      %p259 = pneg %p145
      %p260 = pneg %p142
      %p261 = pneg %p171
      %p262 = pneg %p168
      %p263 = scmp.lt.s32.totalorder %s19, 1
      %s264 = scalar_select %p263, %s19, 1
      %s265 = smul.addr %s264, 4
      %s266 = smul.addr %s265, 8
      %s267 = scalar_lea.vmem %s6, %s266
      %p268 = pneg %p197
      %p269 = pneg %p194
      %p270 = scmp.lt.s32.totalorder %s19, 1
      %s271 = scalar_select %p270, %s19, 1
      %s272 = smul.addr %s271, 4
      %s273 = smul.addr %s272, 8
      %s274 = scalar_lea.vmem %s7, %s273
      %p275 = scmp.lt.s32.totalorder %s19, 1
      %s276 = scalar_select %p275, %s19, 1
      %s277 = smul.addr %s276, 4
      %s278 = scalar_lea.vmem %s0, %s277
      %p279 = scmp.lt.s32.totalorder %s19, 1
      %s280 = scalar_select %p279, %s19, 1
      %s281 = smul.addr %s280, 4
      %s282 = smul.addr %s281, 8
      %s283 = scalar_lea.vmem %s6, %s282
      %p284 = scmp.lt.s32.totalorder %s19, 1
      %s285 = scalar_select %p284, %s19, 1
      %s286 = smul.addr %s285, 4
      %s287 = smul.addr %s286, 8
      %s288 = scalar_lea.vmem %s7, %s287
      %v290 = vld [vmem:[%s1] sm:$0xff]
      %v291 = vld [vmem:[%s1 + $0x8] sm:$0xff]
      %vm292 = vcmask 7168
      %v293 = vsel %vm292, %v290, 0.0
      %v294 = vsel %vm292, %v291, 0.0
      %v295 = vadd.f32 %v293, %v294
      %v296 = vmul.f32 %v295, 0.00390625
      %v297 = vld [vmem:[%s2] sm:$0xff]
      %v298 = vld [vmem:[%s2 + $0x8] sm:$0xff]
      %v299 = vsel %vm292, %v297, 0.0
      %v300 = vsel %vm292, %v298, 0.0
      %v301 = vadd.f32 %v299, %v300
      %v302 = vmul.f32 %v301, 0.00390625
      %v303 = vmul.f32 %v296, %v296
      %v304 = vsub.f32 %v302, %v303
      %v305 = vmax.f32 %v304, 0.0
      %v306 = vld [vmem:[%s3] sm:$0xff]
      %v307 = vadd.f32 %v305, 1e-05
      %v308 = vrsqrt.pop %v307
      %v309 = vmul.f32 %v308, %v307
      %v310 = vmul.f32 %v309, %v308
      %v311 = vmul.f32 0.5, %v310
      %v312 = vsub.f32 1.5, %v311
      %v313 = vmul.f32 %v308, %v312
      %vm314 = vweird.f32 %v307
      %vm315 = vweird.f32 %v308
      %vm316 = vmor %vm314, %vm315
      %v317 = vsel %vm316, %v308, %v313
      %v318 = vmul.f32 %v306, %v317
      %v319 = vld [vmem:[%s4] sm:$0xff]
      %v320 = vmul.f32 %v296, %v318
      %v321 = vsub.f32 %v319, %v320
      %v322 = vld [vmem:[%s5] sm:$0xf]
      %v323 = vld [vmem:[%s5 + $0x4] sm:$0xf]
      %v324 = vld [vmem:[%s5 + $0x8] sm:$0xf]
      %v325 = vld [vmem:[%s5 + $0xc] sm:$0xf]
      %v326 = vld [vmem:[%s278] sm:$0xf]
      %v327 = vunpack.c.l.bf16 %v326
      %329 = vset.pattern.permute.xlu0 0
      %330 = vperm.xlu0 %329, %v318
      %v331 = vpop.permute.xlu0 %330
      %v333 = vmul.f32 %v327, %v331
      %335 = vset.pattern.permute.xlu0 0
      %336 = vperm.xlu0 %335, %v321
      %v337 = vpop.permute.xlu0 %336
      %v339 = vadd.f32 %v333, %v337
      %v340 = vmax.f32 %v339, 0.0
      %v341 = vpack.c.bf16 %v340, %v340
      %v346 = vunpack.c.l.b16 %v322
      %v347 = vunpack.c.l.b16 %v323
      %v348 = vunpack.c.l.b16 %v324
      %v349 = vunpack.c.l.b16 %v325
      %v350 = vpack.c.b16 %v347, %v346
      %v351 = vpack.c.b16 %v349, %v348
      %vm352 = vcmask 64512
      %v354 = vsel %vm352, %v350, 0
      %v357 = vsel %vm352, %v351, 0
      %vm359 = vcmask 1043456
      %v361 = vsel %vm359, %v341, 0
      %363 = vmatpush.bf16.msra.mxu0 0
      %364 = vmatpush.bf16.msra.mxu0 0
      %365 = vmatpush.bf16.msra.mxu0 0
      %366 = vmatpush.bf16.msra.mxu0 0
      %367 = vmatpush.bf16.msra.mxu0 0
      %368 = vmatpush.bf16.msra.mxu0 0
      %369 = vmatpush.bf16.msra.mxu0 0
      %370 = vmatpush.bf16.msra.mxu0 %v361
      %371 = vmatmul.bf16.gmra.mxu0 %v354
      %v372 = vpop.f32.mrf.mxu0
      %v373 = vadd.f32 0.0, %v372
      %v374 = vpop.f32.mrf.mxu0
      %v375 = vadd.f32 0.0, %v374
      %376 = vmatmul.bf16.gmra.mxu0 %v357
      %v377 = vpop.f32.mrf.mxu0
      %v378 = vadd.f32 0.0, %v377
      %v379 = vpop.f32.mrf.mxu0
      %v380 = vadd.f32 0.0, %v379
      %381 = vdwg.mxu0
      %382 = vadd.xlane.f32.xlu0 %v373
      %v383 = vpop.xlane.xlu0 %382
      %384 = vadd.xlane.f32.xlu0 %v375
      %v385 = vpop.xlane.xlu0 %384
      %386 = vadd.xlane.f32.xlu0 %v378
      %v387 = vpop.xlane.xlu0 %386
      %388 = vadd.xlane.f32.xlu0 %v380
      %v389 = vpop.xlane.xlu0 %388
      %v390 = vadd.f32 %v383, 0.0
      %v391 = vadd.f32 %v385, 0.0
      %v392 = vadd.f32 %v387, 0.0
      %v393 = vadd.f32 %v389, 0.0
      %v394 = vmul.f32 %v373, %v373
      %v395 = vmul.f32 %v375, %v375
      %v396 = vmul.f32 %v378, %v378
      %v397 = vmul.f32 %v380, %v380
      %398 = vadd.xlane.f32.xlu0 %v394
      %v399 = vpop.xlane.xlu0 %398
      %400 = vadd.xlane.f32.xlu0 %v395
      %v401 = vpop.xlane.xlu0 %400
      %402 = vadd.xlane.f32.xlu0 %v396
      %v403 = vpop.xlane.xlu0 %402
      %404 = vadd.xlane.f32.xlu0 %v397
      %v405 = vpop.xlane.xlu0 %404
      %v406 = vadd.f32 %v399, 0.0
      %v407 = vadd.f32 %v401, 0.0
      %v408 = vadd.f32 %v403, 0.0
      %v409 = vadd.f32 %v405, 0.0
      %410 = vst.msk [vmem:[%s283] sm:$0xff] %vm292, %v390
      %411 = vst.msk [vmem:[%s283 + $0x8] sm:$0xff] %vm292, %v391
      %412 = vst.msk [vmem:[%s283 + $0x10] sm:$0xff] %vm292, %v392
      %413 = vst.msk [vmem:[%s283 + $0x18] sm:$0xff] %vm292, %v393
      %414 = vst.msk [vmem:[%s288] sm:$0xff] %vm292, %v406
      %415 = vst.msk [vmem:[%s288 + $0x8] sm:$0xff] %vm292, %v407
      %416 = vst.msk [vmem:[%s288 + $0x10] sm:$0xff] %vm292, %v408
      %417 = vst.msk [vmem:[%s288 + $0x18] sm:$0xff] %vm292, %v409
      %p418 = scmp.lt.s32.totalorder %s19, 1
      %s419 = scalar_select %p418, %s19, 1
      %s420 = smul.addr %s419, 4
      %s421 = smul.addr %s420, 8
      %s422 = scalar_lea.vmem %s6, %s421
      %p423 = scmp.lt.s32.totalorder %s19, 1
      %s424 = scalar_select %p423, %s19, 1
      %s425 = smul.addr %s424, 4
      %s426 = smul.addr %s425, 8
      %s427 = scalar_lea.vmem %s7, %s426
      // Predicated region
      $region45: #{bottleneck1d_pallas.6} parent=43 // pred_check
        %p428 = pneg %p168
      $region46: #{bottleneck1d_pallas.6} parent=43 // pred_check_branch
        %430 = sbr.rel (%p428) target = $region48
      $region47: #{bottleneck1d_pallas.6} parent=43 // pred_region
        _
      $region48: #{bottleneck1d_pallas.6} parent=43 // pred_fallthru
        _
      // Predicated region
      $region49: #{bottleneck1d_pallas.6} parent=43 // pred_check
        %p431 = pneg %p194
      $region50: #{bottleneck1d_pallas.6} parent=43 // pred_check_branch
        %433 = sbr.rel (%p431) target = $region52
      $region51: #{bottleneck1d_pallas.6} parent=43 // pred_region
        _
      $region52: #{bottleneck1d_pallas.6} parent=43 // pred_fallthru
        _
    $region44: #{bottleneck1d_pallas.6} parent=5 // pred_fallthru
      _
    %p434 = scmp.le.s32.totalorder 2, %s14
    // Predicated region
    $region53: #{bottleneck1d_pallas.6} parent=5 // pred_check
      %p435 = pneg %p434
    $region54: #{bottleneck1d_pallas.6} parent=5 // pred_check_branch
      %437 = sbr.rel (%p435) target = $region56
    $region55: #{bottleneck1d_pallas.6} parent=5 // pred_region
      %s438 = ssub.s32 %s14, 2
      // Predicated region
      $region57: #{bottleneck1d_pallas.6} parent=55 // pred_check
        %p439 = pneg %p174
      $region58: #{bottleneck1d_pallas.6} parent=55 // pred_check_branch
        %441 = sbr.rel (%p439) target = $region60
      $region59: #{bottleneck1d_pallas.6} parent=55 // pred_region
        %p442 = scmp.lt.s32.totalorder %s20, 1
        %s443 = scalar_select %p442, %s20, 1
        %s444 = smul.addr %s443, 4
        %s445 = smul.addr %s444, 8
        %s446 = scalar_lea.vmem %s6, %s445
      $region60: #{bottleneck1d_pallas.6} parent=55 // pred_fallthru
        _
      // Predicated region
      $region61: #{bottleneck1d_pallas.6} parent=55 // pred_check
        %p447 = pneg %p200
      $region62: #{bottleneck1d_pallas.6} parent=55 // pred_check_branch
        %449 = sbr.rel (%p447) target = $region64
      $region63: #{bottleneck1d_pallas.6} parent=55 // pred_region
        %p450 = scmp.lt.s32.totalorder %s20, 1
        %s451 = scalar_select %p450, %s20, 1
        %s452 = smul.addr %s451, 4
        %s453 = smul.addr %s452, 8
        %s454 = scalar_lea.vmem %s7, %s453
      $region64: #{bottleneck1d_pallas.6} parent=55 // pred_fallthru
        _
    $region56: #{bottleneck1d_pallas.6} parent=5 // pred_fallthru
      _
  $region6: #{bottleneck1d_pallas.6} parent=0 // loop_footer
    %s18 = sadd.s32 1, %s14
  $region7: #{bottleneck1d_pallas.6} parent=0 // loop_footer_branch
    %13 = sbr.rel target = $region3
  $region8: #{bottleneck1d_pallas.6} parent=0 // loop_exit
    _

// kernel: bottleneck1d_pallas.4
$region0: #{bottleneck1d_pallas.4}
  #allocation0 [shape = 'u32[]', space=smem, size = 0x4, offset = 0x4, fixed_abs, tag = 'smem constant byte address 0x4 - core index']
  #allocation1 [shape = 'u32[72,128]{1,0:T(1,128)}', space=vmem, size = 0x9000, scoped, tag = 'internal scratch']
  %s0 = inlined_call_operand.vmem [shape: f32[2,32,128], index: 0, kind: input, shape index: {}]
  %s1 = inlined_call_operand.vmem [shape: bf16[8,32], index: 1, kind: input, shape index: {}]
  %s2 = inlined_call_operand.vmem [shape: bf16[2,8,128], index: 2, kind: output, shape index: {0}]
  %s3 = inlined_call_operand.vmem [shape: f32[2,8,1], index: 3, kind: output, shape index: {1}]
  %s4 = inlined_call_operand.vmem [shape: f32[2,8,1], index: 4, kind: output, shape index: {2}]
  %5 = xla_tuple %s2, %s3, %s4
  %s6 = sld [smem:[#allocation0]]
  $region57: #{bottleneck1d_pallas.4} parent=0
    _
  %s8 = ssub.s32 1, %s6
  %s9 = scalar_select 0, %s8, %s6
  loop: start=0, step=1, limit=4
  $region2: #{bottleneck1d_pallas.4} parent=0 // loop_pre_header
    _
  $region3: #{bottleneck1d_pallas.4} parent=0 // loop_header
    %s11 = sphi 0, %s15
    %p12 = scmp.ge.s32.totalorder %s11, 4
    %s21 = sphi 0, %s23
    %s24 = sphi 0, %s21
    %s25 = sphi 0, %s24
    %s41 = sphi 0, %s25
    %s45 = sphi 0, %s45
    %s47 = sphi 0, %s45
    %s48 = sphi 0, %s47
    %s62 = sphi 0, %s48
    %s68 = sphi 0, %s70
    %s71 = sphi 0, %s68
    %s72 = sphi 0, %s71
    %s88 = sphi 0, %s72
    %s94 = sphi 0, %s96
    %s97 = sphi 0, %s94
    %s98 = sphi 0, %s97
    %s114 = sphi 0, %s98
    %s120 = sphi 0, %s122
    %s123 = sphi 0, %s120
    %s124 = sphi 0, %s123
    %s140 = sphi 0, %s124
  $region4: #{bottleneck1d_pallas.4} parent=0 // loop_header_branch
    %14 = sbr.rel (%p12) target = $region8
  $region5: #{bottleneck1d_pallas.4} parent=0 // loop_body
    %s16 = ssub.s32 %s11, 1
    %s17 = ssub.s32 %s11, 2
    %s18 = sadd.s32 %s11, 1
    %s19 = ssub.s32 %s11, %s18
    %p20 = scmp.eq.s32.totalorder %s19, 0
    %s22 = sadd.s32 %s21, 1
    %s23 = scalar_select %p20, %s21, %s22
    %p26 = pneg %p20
    %p27 = scmp.eq.s32.totalorder %s11, 1
    %p28 = por %p26, %p27
    %p29 = scmp.ne.s32.totalorder %s21, %s24
    %p30 = scmp.eq.s32.totalorder %s11, 0
    %p31 = por %p29, %p30
    %p32 = scmp.ne.s32.totalorder %s21, %s24
    %p33 = scmp.eq.s32.totalorder %s16, 1
    %p34 = por %p32, %p33
    %p35 = scmp.ne.s32.totalorder %s24, %s25
    %p36 = scmp.eq.s32.totalorder %s16, 0
    %p37 = por %p35, %p36
    %p38 = scmp.ne.s32.totalorder %s24, %s25
    %p39 = scmp.eq.s32.totalorder %s17, 1
    %p40 = por %p38, %p39
    %p42 = scmp.ne.s32.totalorder %s25, %s41
    %p43 = scmp.eq.s32.totalorder %s17, 0
    %p44 = por %p42, %p43
    %s46 = sadd.s32 %s45, 1
    %p49 = scmp.eq.s32.totalorder %s11, 1
    %p50 = scmp.ne.s32.totalorder %s45, %s47
    %p51 = scmp.eq.s32.totalorder %s11, 0
    %p52 = por %p50, %p51
    %p53 = scmp.ne.s32.totalorder %s45, %s47
    %p54 = scmp.eq.s32.totalorder %s16, 1
    %p55 = por %p53, %p54
    %p56 = scmp.ne.s32.totalorder %s47, %s48
    %p57 = scmp.eq.s32.totalorder %s16, 0
    %p58 = por %p56, %p57
    %p59 = scmp.ne.s32.totalorder %s47, %s48
    %p60 = scmp.eq.s32.totalorder %s17, 1
    %p61 = por %p59, %p60
    %p63 = scmp.ne.s32.totalorder %s48, %s62
    %p64 = scmp.eq.s32.totalorder %s17, 0
    %p65 = por %p63, %p64
    %s66 = ssub.s32 %s11, %s18
    %p67 = scmp.eq.s32.totalorder %s66, 0
    %s69 = sadd.s32 %s68, 1
    %s70 = scalar_select %p67, %s68, %s69
    %p73 = pneg %p67
    %p74 = scmp.eq.s32.totalorder %s11, 1
    %p75 = por %p73, %p74
    %p76 = scmp.ne.s32.totalorder %s68, %s71
    %p77 = scmp.eq.s32.totalorder %s11, 0
    %p78 = por %p76, %p77
    %p79 = scmp.ne.s32.totalorder %s68, %s71
    %p80 = scmp.eq.s32.totalorder %s16, 1
    %p81 = por %p79, %p80
    %p82 = scmp.ne.s32.totalorder %s71, %s72
    %p83 = scmp.eq.s32.totalorder %s16, 0
    %p84 = por %p82, %p83
    %p85 = scmp.ne.s32.totalorder %s71, %s72
    %p86 = scmp.eq.s32.totalorder %s17, 1
    %p87 = por %p85, %p86
    %p89 = scmp.ne.s32.totalorder %s72, %s88
    %p90 = scmp.eq.s32.totalorder %s17, 0
    %p91 = por %p89, %p90
    %s92 = ssub.s32 %s11, %s18
    %p93 = scmp.eq.s32.totalorder %s92, 0
    %s95 = sadd.s32 %s94, 1
    %s96 = scalar_select %p93, %s94, %s95
    %p99 = pneg %p93
    %p100 = scmp.eq.s32.totalorder %s11, 1
    %p101 = por %p99, %p100
    %p102 = scmp.ne.s32.totalorder %s94, %s97
    %p103 = scmp.eq.s32.totalorder %s11, 0
    %p104 = por %p102, %p103
    %p105 = scmp.ne.s32.totalorder %s94, %s97
    %p106 = scmp.eq.s32.totalorder %s16, 1
    %p107 = por %p105, %p106
    %p108 = scmp.ne.s32.totalorder %s97, %s98
    %p109 = scmp.eq.s32.totalorder %s16, 0
    %p110 = por %p108, %p109
    %p111 = scmp.ne.s32.totalorder %s97, %s98
    %p112 = scmp.eq.s32.totalorder %s17, 1
    %p113 = por %p111, %p112
    %p115 = scmp.ne.s32.totalorder %s98, %s114
    %p116 = scmp.eq.s32.totalorder %s17, 0
    %p117 = por %p115, %p116
    %s118 = ssub.s32 %s11, %s18
    %p119 = scmp.eq.s32.totalorder %s118, 0
    %s121 = sadd.s32 %s120, 1
    %s122 = scalar_select %p119, %s120, %s121
    %p125 = pneg %p119
    %p126 = scmp.eq.s32.totalorder %s11, 1
    %p127 = por %p125, %p126
    %p128 = scmp.ne.s32.totalorder %s120, %s123
    %p129 = scmp.eq.s32.totalorder %s11, 0
    %p130 = por %p128, %p129
    %p131 = scmp.ne.s32.totalorder %s120, %s123
    %p132 = scmp.eq.s32.totalorder %s16, 1
    %p133 = por %p131, %p132
    %p134 = scmp.ne.s32.totalorder %s123, %s124
    %p135 = scmp.eq.s32.totalorder %s16, 0
    %p136 = por %p134, %p135
    %p137 = scmp.ne.s32.totalorder %s123, %s124
    %p138 = scmp.eq.s32.totalorder %s17, 1
    %p139 = por %p137, %p138
    %p141 = scmp.ne.s32.totalorder %s124, %s140
    %p142 = scmp.eq.s32.totalorder %s17, 0
    %p143 = por %p141, %p142
    %p144 = scmp.le.s32.totalorder 1, %s11
    %p145 = scmp.lt.s32.totalorder %s11, 3
    %p146 = pnand %p144, %p145
    %p147 = pneg %p146
    // Predicated region
    $region9: #{bottleneck1d_pallas.4} parent=5 // pred_check
      _
    $region10: #{bottleneck1d_pallas.4} parent=5 // pred_check_branch
      %149 = sbr.rel (%p146) target = $region12
    $region11: #{bottleneck1d_pallas.4} parent=5 // pred_region
      %s150 = ssub.s32 %s11, 1
      // Predicated region
      $region13: #{bottleneck1d_pallas.4} parent=11 // pred_check
        %p151 = pneg %p58
      $region14: #{bottleneck1d_pallas.4} parent=11 // pred_check_branch
        %153 = sbr.rel (%p151) target = $region16
      $region15: #{bottleneck1d_pallas.4} parent=11 // pred_region
        _
      $region16: #{bottleneck1d_pallas.4} parent=11 // pred_fallthru
        _
    $region12: #{bottleneck1d_pallas.4} parent=5 // pred_fallthru
      _
    %p154 = scmp.lt.s32.totalorder %s11, 2
    // Predicated region
    $region17: #{bottleneck1d_pallas.4} parent=5 // pred_check
      %p155 = pneg %p154
    $region18: #{bottleneck1d_pallas.4} parent=5 // pred_check_branch
      %157 = sbr.rel (%p155) target = $region20
    $region19: #{bottleneck1d_pallas.4} parent=5 // pred_region
      // Predicated region
      $region21: #{bottleneck1d_pallas.4} parent=19 // pred_check
        %p158 = pneg %p31
      $region22: #{bottleneck1d_pallas.4} parent=19 // pred_check_branch
        %160 = sbr.rel (%p158) target = $region24
      $region23: #{bottleneck1d_pallas.4} parent=19 // pred_region
        %p161 = scmp.lt.s32.totalorder %s11, 1
        %s162 = scalar_select %p161, %s11, 1
        %s163 = smul.addr %s162, 4
        %s164 = smul.addr %s163, 8
        %s165 = scalar_lea.vmem %s0, %s164
      $region24: #{bottleneck1d_pallas.4} parent=19 // pred_fallthru
        _
    $region20: #{bottleneck1d_pallas.4} parent=5 // pred_fallthru
      _
    %p166 = scmp.le.s32.totalorder 1, %s11
    %p167 = scmp.lt.s32.totalorder %s11, 3
    %p168 = pnand %p166, %p167
    %p169 = pneg %p168
    // Predicated region
    $region25: #{bottleneck1d_pallas.4} parent=5 // pred_check
      _
    $region26: #{bottleneck1d_pallas.4} parent=5 // pred_check_branch
      %171 = sbr.rel (%p168) target = $region28
    $region27: #{bottleneck1d_pallas.4} parent=5 // pred_region
      %s172 = ssub.s32 %s11, 1
      %p173 = scmp.lt.s32.totalorder %s16, 1
      %s174 = scalar_select %p173, %s16, 1
      %s175 = smul.addr %s174, 4
      %s176 = smul.addr %s175, 8
      %s177 = scalar_lea.vmem %s0, %s176
      %p178 = pneg %p37
      %p179 = pneg %p34
      %p180 = pneg %p58
      %p181 = pneg %p55
      %p182 = pneg %p84
      %p183 = pneg %p81
      %p184 = scmp.lt.s32.totalorder %s16, 1
      %s185 = scalar_select %p184, %s16, 1
      %s186 = smul.addr %s185, 4
      %s187 = scalar_lea.vmem %s2, %s186
      %p188 = pneg %p110
      %p189 = pneg %p107
      %p190 = scmp.lt.s32.totalorder %s16, 1
      %s191 = scalar_select %p190, %s16, 1
      %s192 = smul.addr %s191, 8
      %s193 = scalar_lea.vmem %s3, %s192
      %p194 = pneg %p136
      %p195 = pneg %p133
      %p196 = scmp.lt.s32.totalorder %s16, 1
      %s197 = scalar_select %p196, %s16, 1
      %s198 = smul.addr %s197, 8
      %s199 = scalar_lea.vmem %s4, %s198
      %p200 = scmp.lt.s32.totalorder %s16, 1
      %s201 = scalar_select %p200, %s16, 1
      %s202 = smul.addr %s201, 4
      %s203 = smul.addr %s202, 8
      %s204 = scalar_lea.vmem %s0, %s203
      %p205 = scmp.lt.s32.totalorder %s16, 1
      %s206 = scalar_select %p205, %s16, 1
      %s207 = smul.addr %s206, 4
      %s208 = scalar_lea.vmem %s2, %s207
      %p209 = scmp.lt.s32.totalorder %s16, 1
      %s210 = scalar_select %p209, %s16, 1
      %s211 = smul.addr %s210, 8
      %s212 = scalar_lea.vmem %s3, %s211
      %p213 = scmp.lt.s32.totalorder %s16, 1
      %s214 = scalar_select %p213, %s16, 1
      %s215 = smul.addr %s214, 8
      %s216 = scalar_lea.vmem %s4, %s215
      %v218 = vld [vmem:[%s1] sm:$0xf]
      %v219 = vld [vmem:[%s204] sm:$0xff]
      %v220 = vld [vmem:[%s204 + $0x8] sm:$0xff]
      %v221 = vld [vmem:[%s204 + $0x10] sm:$0xff]
      %v222 = vld [vmem:[%s204 + $0x18] sm:$0xff]
      %v223 = vpack.c.bf16 %v220, %v219
      %v224 = vpack.c.bf16 %v222, %v221
      %vm225 = vcmask 261120
      %v227 = vsel %vm225, %v218, 0
      %229 = vmatpush.bf16.msra.mxu0 0
      %230 = vmatpush.bf16.msra.mxu0 0
      %231 = vmatpush.bf16.msra.mxu0 0
      %232 = vmatpush.bf16.msra.mxu0 0
      %233 = vmatpush.bf16.msra.mxu0 0
      %234 = vmatpush.bf16.msra.mxu0 0
      %235 = vmatpush.bf16.msra.mxu0 %v224
      %236 = vmatpush.bf16.msra.mxu0 %v223
      %237 = vmatmul.bf16.gmra.mxu0 %v227
      %v238 = vpop.f32.mrf.mxu0
      %v239 = vadd.f32 0.0, %v238
      %v240 = vpop.f32.mrf.mxu0
      %241 = vdwg.mxu0
      %v242 = vpack.c.bf16 %v239, %v239
      %243 = vst [vmem:[%s208] sm:$0xf] %v242
      %v244 = vunpack.c.l.bf16 %v242
      %245 = vadd.xlane.f32.xlu0 %v244
      %v246 = vpop.xlane.xlu0 %245
      %v247 = vadd.f32 %v246, 0.0
      %v248 = vmul.f32 %v244, %v244
      %249 = vadd.xlane.f32.xlu0 %v248
      %v250 = vpop.xlane.xlu0 %249
      %v251 = vadd.f32 %v250, 0.0
      %vm252 = vcmask 7168
      %253 = vst.msk [vmem:[%s212] sm:$0xff] %vm252, %v247
      %254 = vst.msk [vmem:[%s216] sm:$0xff] %vm252, %v251
      %p255 = scmp.lt.s32.totalorder %s16, 1
      %s256 = scalar_select %p255, %s16, 1
      %s257 = smul.addr %s256, 4
      %s258 = scalar_lea.vmem %s2, %s257
      %p259 = scmp.lt.s32.totalorder %s16, 1
      %s260 = scalar_select %p259, %s16, 1
      %s261 = smul.addr %s260, 8
      %s262 = scalar_lea.vmem %s3, %s261
      %p263 = scmp.lt.s32.totalorder %s16, 1
      %s264 = scalar_select %p263, %s16, 1
      %s265 = smul.addr %s264, 8
      %s266 = scalar_lea.vmem %s4, %s265
      // Predicated region
      $region29: #{bottleneck1d_pallas.4} parent=27 // pred_check
        %p267 = pneg %p81
      $region30: #{bottleneck1d_pallas.4} parent=27 // pred_check_branch
        %269 = sbr.rel (%p267) target = $region32
      $region31: #{bottleneck1d_pallas.4} parent=27 // pred_region
        _
      $region32: #{bottleneck1d_pallas.4} parent=27 // pred_fallthru
        _
      // Predicated region
      $region33: #{bottleneck1d_pallas.4} parent=27 // pred_check
        %p270 = pneg %p107
      $region34: #{bottleneck1d_pallas.4} parent=27 // pred_check_branch
        %272 = sbr.rel (%p270) target = $region36
      $region35: #{bottleneck1d_pallas.4} parent=27 // pred_region
        _
      $region36: #{bottleneck1d_pallas.4} parent=27 // pred_fallthru
        _
      // Predicated region
      $region37: #{bottleneck1d_pallas.4} parent=27 // pred_check
        %p273 = pneg %p133
      $region38: #{bottleneck1d_pallas.4} parent=27 // pred_check_branch
        %275 = sbr.rel (%p273) target = $region40
      $region39: #{bottleneck1d_pallas.4} parent=27 // pred_region
        _
      $region40: #{bottleneck1d_pallas.4} parent=27 // pred_fallthru
        _
    $region28: #{bottleneck1d_pallas.4} parent=5 // pred_fallthru
      _
    %p276 = scmp.le.s32.totalorder 2, %s11
    // Predicated region
    $region41: #{bottleneck1d_pallas.4} parent=5 // pred_check
      %p277 = pneg %p276
    $region42: #{bottleneck1d_pallas.4} parent=5 // pred_check_branch
      %279 = sbr.rel (%p277) target = $region44
    $region43: #{bottleneck1d_pallas.4} parent=5 // pred_region
      %s280 = ssub.s32 %s11, 2
      // Predicated region
      $region45: #{bottleneck1d_pallas.4} parent=43 // pred_check
        %p281 = pneg %p87
      $region46: #{bottleneck1d_pallas.4} parent=43 // pred_check_branch
        %283 = sbr.rel (%p281) target = $region48
      $region47: #{bottleneck1d_pallas.4} parent=43 // pred_region
        %p284 = scmp.lt.s32.totalorder %s17, 1
        %s285 = scalar_select %p284, %s17, 1
        %s286 = smul.addr %s285, 4
        %s287 = scalar_lea.vmem %s2, %s286
      $region48: #{bottleneck1d_pallas.4} parent=43 // pred_fallthru
        _
      // Predicated region
      $region49: #{bottleneck1d_pallas.4} parent=43 // pred_check
        %p288 = pneg %p113
      $region50: #{bottleneck1d_pallas.4} parent=43 // pred_check_branch
        %290 = sbr.rel (%p288) target = $region52
      $region51: #{bottleneck1d_pallas.4} parent=43 // pred_region
        %p291 = scmp.lt.s32.totalorder %s17, 1
        %s292 = scalar_select %p291, %s17, 1
        %s293 = smul.addr %s292, 8
        %s294 = scalar_lea.vmem %s3, %s293
      $region52: #{bottleneck1d_pallas.4} parent=43 // pred_fallthru
        _
      // Predicated region
      $region53: #{bottleneck1d_pallas.4} parent=43 // pred_check
        %p295 = pneg %p139
      $region54: #{bottleneck1d_pallas.4} parent=43 // pred_check_branch
        %297 = sbr.rel (%p295) target = $region56
      $region55: #{bottleneck1d_pallas.4} parent=43 // pred_region
        %p298 = scmp.lt.s32.totalorder %s17, 1
        %s299 = scalar_select %p298, %s17, 1
        %s300 = smul.addr %s299, 8
        %s301 = scalar_lea.vmem %s4, %s300
      $region56: #{bottleneck1d_pallas.4} parent=43 // pred_fallthru
        _
    $region44: #{bottleneck1d_pallas.4} parent=5 // pred_fallthru
      _
  $region6: #{bottleneck1d_pallas.4} parent=0 // loop_footer
    %s15 = sadd.s32 1, %s11
  $region7: #{bottleneck1d_pallas.4} parent=0 // loop_footer_branch
    %10 = sbr.rel target = $region3
  $region8: #{bottleneck1d_pallas.4} parent=0 // loop_exit
    _

// kernel: bottleneck1d_pallas.7
$region0: #{bottleneck1d_pallas.7}
  #allocation0 [shape = 'u32[]', space=smem, size = 0x4, offset = 0x4, fixed_abs, tag = 'smem constant byte address 0x4 - core index']
  #allocation1 [shape = 'u32[72,128]{1,0:T(1,128)}', space=vmem, size = 0x9000, scoped, tag = 'internal scratch']
  %s0 = inlined_call_operand.vmem [shape: bf16[2,8,128], index: 0, kind: input, shape index: {}]
  %s1 = inlined_call_operand.vmem [shape: f32[2,8,1], index: 1, kind: input, shape index: {}]
  %s2 = inlined_call_operand.vmem [shape: f32[2,8,1], index: 2, kind: input, shape index: {}]
  %s3 = inlined_call_operand.vmem [shape: f32[8,1], index: 3, kind: input, shape index: {}]
  %s4 = inlined_call_operand.vmem [shape: f32[8,1], index: 4, kind: input, shape index: {}]
  %s5 = inlined_call_operand.vmem [shape: bf16[32,8], index: 5, kind: input, shape index: {}]
  %s6 = inlined_call_operand.vmem [shape: f32[2,32,1], index: 6, kind: input, shape index: {}]
  %s7 = inlined_call_operand.vmem [shape: f32[2,32,1], index: 7, kind: input, shape index: {}]
  %s8 = inlined_call_operand.vmem [shape: f32[32,1], index: 8, kind: input, shape index: {}]
  %s9 = inlined_call_operand.vmem [shape: f32[32,1], index: 9, kind: input, shape index: {}]
  %s10 = inlined_call_operand.vmem [shape: f32[2,32,128], index: 10, kind: input, shape index: {}]
  %s11 = inlined_call_operand.hbm [shape: f32[2,32,128], index: 11, kind: output, shape index: {}]
  %s12 = sld [smem:[#allocation0]]
  $region77: #{bottleneck1d_pallas.7} parent=0
    _
  %s14 = ssub.s32 1, %s12
  %s15 = scalar_select 0, %s14, %s12
  $region1: #{bottleneck1d_pallas.7} parent=0
    #allocation2 [shape = 'u8[32768]{0}', space=vmem, size = 0x8000, scoped, tag = 'output window, operand 0']
    #allocation3 [shape = 's32[2]{0}', space=sflag, size = 0x8, scoped, tag = 'scoped memory for bottleneck1d_pallas.7']
    %16 = vsyncpa [#allocation3], 0
    %s17 = scalar_lea.sflag [#allocation3], 1
    %18 = vsyncpa %s17, 0
    loop: start=0, step=1, limit=4
    $region2: #{bottleneck1d_pallas.7} parent=1 // loop_pre_header
      _
    $region3: #{bottleneck1d_pallas.7} parent=1 // loop_header
      %s20 = sphi 0, %s24
      %p21 = scmp.ge.s32.totalorder %s20, 4
      %s30 = sphi 0, %s32
      %s33 = sphi 0, %s30
      %s34 = sphi 0, %s33
      %s50 = sphi 0, %s34
      %s54 = sphi 0, %s54
      %s56 = sphi 0, %s54
      %s57 = sphi 0, %s56
      %s71 = sphi 0, %s57
      %s75 = sphi 0, %s75
      %s77 = sphi 0, %s75
      %s78 = sphi 0, %s77
      %s92 = sphi 0, %s78
      %s96 = sphi 0, %s96
      %s98 = sphi 0, %s96
      %s99 = sphi 0, %s98
      %s113 = sphi 0, %s99
      %s117 = sphi 0, %s117
      %s119 = sphi 0, %s117
      %s120 = sphi 0, %s119
      %s134 = sphi 0, %s120
      %s138 = sphi 0, %s138
      %s140 = sphi 0, %s138
      %s141 = sphi 0, %s140
      %s155 = sphi 0, %s141
      %s159 = sphi 0, %s159
      %s161 = sphi 0, %s159
      %s162 = sphi 0, %s161
      %s176 = sphi 0, %s162
      %s180 = sphi 0, %s180
      %s182 = sphi 0, %s180
      %s183 = sphi 0, %s182
      %s197 = sphi 0, %s183
      %s201 = sphi 0, %s201
      %s203 = sphi 0, %s201
      %s204 = sphi 0, %s203
      %s218 = sphi 0, %s204
      %s222 = sphi 0, %s222
      %s224 = sphi 0, %s222
      %s225 = sphi 0, %s224
      %s239 = sphi 0, %s225
      %s245 = sphi 0, %s247
      %s248 = sphi 0, %s245
      %s249 = sphi 0, %s248
      %s265 = sphi 0, %s249
      %s271 = sphi 0, %s273
      %s274 = sphi 0, %s271
      %s275 = sphi 0, %s274
      %s291 = sphi 0, %s275
    $region4: #{bottleneck1d_pallas.7} parent=1 // loop_header_branch
      %23 = sbr.rel (%p21) target = $region8
    $region5: #{bottleneck1d_pallas.7} parent=1 // loop_body
      %s25 = ssub.s32 %s20, 1
      %s26 = ssub.s32 %s20, 2
      %s27 = sadd.s32 %s20, 1
      %s28 = ssub.s32 %s20, %s27
      %p29 = scmp.eq.s32.totalorder %s28, 0
      %s31 = sadd.s32 %s30, 1
      %s32 = scalar_select %p29, %s30, %s31
      %p35 = pneg %p29
      %p36 = scmp.eq.s32.totalorder %s20, 1
      %p37 = por %p35, %p36
      %p38 = scmp.ne.s32.totalorder %s30, %s33
      %p39 = scmp.eq.s32.totalorder %s20, 0
      %p40 = por %p38, %p39
      %p41 = scmp.ne.s32.totalorder %s30, %s33
      %p42 = scmp.eq.s32.totalorder %s25, 1
      %p43 = por %p41, %p42
      %p44 = scmp.ne.s32.totalorder %s33, %s34
      %p45 = scmp.eq.s32.totalorder %s25, 0
      %p46 = por %p44, %p45
      %p47 = scmp.ne.s32.totalorder %s33, %s34
      %p48 = scmp.eq.s32.totalorder %s26, 1
      %p49 = por %p47, %p48
      %p51 = scmp.ne.s32.totalorder %s34, %s50
      %p52 = scmp.eq.s32.totalorder %s26, 0
      %p53 = por %p51, %p52
      %s55 = sadd.s32 %s54, 1
      %p58 = scmp.eq.s32.totalorder %s20, 1
      %p59 = scmp.ne.s32.totalorder %s54, %s56
      %p60 = scmp.eq.s32.totalorder %s20, 0
      %p61 = por %p59, %p60
      %p62 = scmp.ne.s32.totalorder %s54, %s56
      %p63 = scmp.eq.s32.totalorder %s25, 1
      %p64 = por %p62, %p63
      %p65 = scmp.ne.s32.totalorder %s56, %s57
      %p66 = scmp.eq.s32.totalorder %s25, 0
      %p67 = por %p65, %p66
      %p68 = scmp.ne.s32.totalorder %s56, %s57
      %p69 = scmp.eq.s32.totalorder %s26, 1
      %p70 = por %p68, %p69
      %p72 = scmp.ne.s32.totalorder %s57, %s71
      %p73 = scmp.eq.s32.totalorder %s26, 0
      %p74 = por %p72, %p73
      %s76 = sadd.s32 %s75, 1
      %p79 = scmp.eq.s32.totalorder %s20, 1
      %p80 = scmp.ne.s32.totalorder %s75, %s77
      %p81 = scmp.eq.s32.totalorder %s20, 0
      %p82 = por %p80, %p81
      %p83 = scmp.ne.s32.totalorder %s75, %s77
      %p84 = scmp.eq.s32.totalorder %s25, 1
      %p85 = por %p83, %p84
      %p86 = scmp.ne.s32.totalorder %s77, %s78
      %p87 = scmp.eq.s32.totalorder %s25, 0
      %p88 = por %p86, %p87
      %p89 = scmp.ne.s32.totalorder %s77, %s78
      %p90 = scmp.eq.s32.totalorder %s26, 1
      %p91 = por %p89, %p90
      %p93 = scmp.ne.s32.totalorder %s78, %s92
      %p94 = scmp.eq.s32.totalorder %s26, 0
      %p95 = por %p93, %p94
      %s97 = sadd.s32 %s96, 1
      %p100 = scmp.eq.s32.totalorder %s20, 1
      %p101 = scmp.ne.s32.totalorder %s96, %s98
      %p102 = scmp.eq.s32.totalorder %s20, 0
      %p103 = por %p101, %p102
      %p104 = scmp.ne.s32.totalorder %s96, %s98
      %p105 = scmp.eq.s32.totalorder %s25, 1
      %p106 = por %p104, %p105
      %p107 = scmp.ne.s32.totalorder %s98, %s99
      %p108 = scmp.eq.s32.totalorder %s25, 0
      %p109 = por %p107, %p108
      %p110 = scmp.ne.s32.totalorder %s98, %s99
      %p111 = scmp.eq.s32.totalorder %s26, 1
      %p112 = por %p110, %p111
      %p114 = scmp.ne.s32.totalorder %s99, %s113
      %p115 = scmp.eq.s32.totalorder %s26, 0
      %p116 = por %p114, %p115
      %s118 = sadd.s32 %s117, 1
      %p121 = scmp.eq.s32.totalorder %s20, 1
      %p122 = scmp.ne.s32.totalorder %s117, %s119
      %p123 = scmp.eq.s32.totalorder %s20, 0
      %p124 = por %p122, %p123
      %p125 = scmp.ne.s32.totalorder %s117, %s119
      %p126 = scmp.eq.s32.totalorder %s25, 1
      %p127 = por %p125, %p126
      %p128 = scmp.ne.s32.totalorder %s119, %s120
      %p129 = scmp.eq.s32.totalorder %s25, 0
      %p130 = por %p128, %p129
      %p131 = scmp.ne.s32.totalorder %s119, %s120
      %p132 = scmp.eq.s32.totalorder %s26, 1
      %p133 = por %p131, %p132
      %p135 = scmp.ne.s32.totalorder %s120, %s134
      %p136 = scmp.eq.s32.totalorder %s26, 0
      %p137 = por %p135, %p136
      %s139 = sadd.s32 %s138, 1
      %p142 = scmp.eq.s32.totalorder %s20, 1
      %p143 = scmp.ne.s32.totalorder %s138, %s140
      %p144 = scmp.eq.s32.totalorder %s20, 0
      %p145 = por %p143, %p144
      %p146 = scmp.ne.s32.totalorder %s138, %s140
      %p147 = scmp.eq.s32.totalorder %s25, 1
      %p148 = por %p146, %p147
      %p149 = scmp.ne.s32.totalorder %s140, %s141
      %p150 = scmp.eq.s32.totalorder %s25, 0
      %p151 = por %p149, %p150
      %p152 = scmp.ne.s32.totalorder %s140, %s141
      %p153 = scmp.eq.s32.totalorder %s26, 1
      %p154 = por %p152, %p153
      %p156 = scmp.ne.s32.totalorder %s141, %s155
      %p157 = scmp.eq.s32.totalorder %s26, 0
      %p158 = por %p156, %p157
      %s160 = sadd.s32 %s159, 1
      %p163 = scmp.eq.s32.totalorder %s20, 1
      %p164 = scmp.ne.s32.totalorder %s159, %s161
      %p165 = scmp.eq.s32.totalorder %s20, 0
      %p166 = por %p164, %p165
      %p167 = scmp.ne.s32.totalorder %s159, %s161
      %p168 = scmp.eq.s32.totalorder %s25, 1
      %p169 = por %p167, %p168
      %p170 = scmp.ne.s32.totalorder %s161, %s162
      %p171 = scmp.eq.s32.totalorder %s25, 0
      %p172 = por %p170, %p171
      %p173 = scmp.ne.s32.totalorder %s161, %s162
      %p174 = scmp.eq.s32.totalorder %s26, 1
      %p175 = por %p173, %p174
      %p177 = scmp.ne.s32.totalorder %s162, %s176
      %p178 = scmp.eq.s32.totalorder %s26, 0
      %p179 = por %p177, %p178
      %s181 = sadd.s32 %s180, 1
      %p184 = scmp.eq.s32.totalorder %s20, 1
      %p185 = scmp.ne.s32.totalorder %s180, %s182
      %p186 = scmp.eq.s32.totalorder %s20, 0
      %p187 = por %p185, %p186
      %p188 = scmp.ne.s32.totalorder %s180, %s182
      %p189 = scmp.eq.s32.totalorder %s25, 1
      %p190 = por %p188, %p189
      %p191 = scmp.ne.s32.totalorder %s182, %s183
      %p192 = scmp.eq.s32.totalorder %s25, 0
      %p193 = por %p191, %p192
      %p194 = scmp.ne.s32.totalorder %s182, %s183
      %p195 = scmp.eq.s32.totalorder %s26, 1
      %p196 = por %p194, %p195
      %p198 = scmp.ne.s32.totalorder %s183, %s197
      %p199 = scmp.eq.s32.totalorder %s26, 0
      %p200 = por %p198, %p199
      %s202 = sadd.s32 %s201, 1
      %p205 = scmp.eq.s32.totalorder %s20, 1
      %p206 = scmp.ne.s32.totalorder %s201, %s203
      %p207 = scmp.eq.s32.totalorder %s20, 0
      %p208 = por %p206, %p207
      %p209 = scmp.ne.s32.totalorder %s201, %s203
      %p210 = scmp.eq.s32.totalorder %s25, 1
      %p211 = por %p209, %p210
      %p212 = scmp.ne.s32.totalorder %s203, %s204
      %p213 = scmp.eq.s32.totalorder %s25, 0
      %p214 = por %p212, %p213
      %p215 = scmp.ne.s32.totalorder %s203, %s204
      %p216 = scmp.eq.s32.totalorder %s26, 1
      %p217 = por %p215, %p216
      %p219 = scmp.ne.s32.totalorder %s204, %s218
      %p220 = scmp.eq.s32.totalorder %s26, 0
      %p221 = por %p219, %p220
      %s223 = sadd.s32 %s222, 1
      %p226 = scmp.eq.s32.totalorder %s20, 1
      %p227 = scmp.ne.s32.totalorder %s222, %s224
      %p228 = scmp.eq.s32.totalorder %s20, 0
      %p229 = por %p227, %p228
      %p230 = scmp.ne.s32.totalorder %s222, %s224
      %p231 = scmp.eq.s32.totalorder %s25, 1
      %p232 = por %p230, %p231
      %p233 = scmp.ne.s32.totalorder %s224, %s225
      %p234 = scmp.eq.s32.totalorder %s25, 0
      %p235 = por %p233, %p234
      %p236 = scmp.ne.s32.totalorder %s224, %s225
      %p237 = scmp.eq.s32.totalorder %s26, 1
      %p238 = por %p236, %p237
      %p240 = scmp.ne.s32.totalorder %s225, %s239
      %p241 = scmp.eq.s32.totalorder %s26, 0
      %p242 = por %p240, %p241
      %s243 = ssub.s32 %s20, %s27
      %p244 = scmp.eq.s32.totalorder %s243, 0
      %s246 = sadd.s32 %s245, 1
      %s247 = scalar_select %p244, %s245, %s246
      %p250 = pneg %p244
      %p251 = scmp.eq.s32.totalorder %s20, 1
      %p252 = por %p250, %p251
      %p253 = scmp.ne.s32.totalorder %s245, %s248
      %p254 = scmp.eq.s32.totalorder %s20, 0
      %p255 = por %p253, %p254
      %p256 = scmp.ne.s32.totalorder %s245, %s248
      %p257 = scmp.eq.s32.totalorder %s25, 1
      %p258 = por %p256, %p257
      %p259 = scmp.ne.s32.totalorder %s248, %s249
      %p260 = scmp.eq.s32.totalorder %s25, 0
      %p261 = por %p259, %p260
      %p262 = scmp.ne.s32.totalorder %s248, %s249
      %p263 = scmp.eq.s32.totalorder %s26, 1
      %p264 = por %p262, %p263
      %p266 = scmp.ne.s32.totalorder %s249, %s265
      %p267 = scmp.eq.s32.totalorder %s26, 0
      %p268 = por %p266, %p267
      %s269 = ssub.s32 %s20, %s27
      %p270 = scmp.eq.s32.totalorder %s269, 0
      %s272 = sadd.s32 %s271, 1
      %s273 = scalar_select %p270, %s271, %s272
      %p276 = pneg %p270
      %p277 = scmp.eq.s32.totalorder %s20, 1
      %p278 = por %p276, %p277
      %p279 = scmp.ne.s32.totalorder %s271, %s274
      %p280 = scmp.eq.s32.totalorder %s20, 0
      %p281 = por %p279, %p280
      %p282 = scmp.ne.s32.totalorder %s271, %s274
      %p283 = scmp.eq.s32.totalorder %s25, 1
      %p284 = por %p282, %p283
      %p285 = scmp.ne.s32.totalorder %s274, %s275
      %p286 = scmp.eq.s32.totalorder %s25, 0
      %p287 = por %p285, %p286
      %p288 = scmp.ne.s32.totalorder %s274, %s275
      %p289 = scmp.eq.s32.totalorder %s26, 1
      %p290 = por %p288, %p289
      %p292 = scmp.ne.s32.totalorder %s275, %s291
      %p293 = scmp.eq.s32.totalorder %s26, 0
      %p294 = por %p292, %p293
      %p295 = scmp.le.s32.totalorder 1, %s20
      %p296 = scmp.lt.s32.totalorder %s20, 3
      %p297 = pnand %p295, %p296
      %p298 = pneg %p297
      // Predicated region
      $region9: #{bottleneck1d_pallas.7} parent=5 // pred_check
        _
      $region10: #{bottleneck1d_pallas.7} parent=5 // pred_check_branch
        %300 = sbr.rel (%p297) target = $region12
      $region11: #{bottleneck1d_pallas.7} parent=5 // pred_region
        %s301 = ssub.s32 %s20, 1
        // Predicated region
        $region13: #{bottleneck1d_pallas.7} parent=11 // pred_check
          %p302 = pneg %p67
        $region14: #{bottleneck1d_pallas.7} parent=11 // pred_check_branch
          %304 = sbr.rel (%p302) target = $region16
        $region15: #{bottleneck1d_pallas.7} parent=11 // pred_region
          _
        $region16: #{bottleneck1d_pallas.7} parent=11 // pred_fallthru
          _
        // Predicated region
        $region17: #{bottleneck1d_pallas.7} parent=11 // pred_check
          %p305 = pneg %p88
        $region18: #{bottleneck1d_pallas.7} parent=11 // pred_check_branch
          %307 = sbr.rel (%p305) target = $region20
        $region19: #{bottleneck1d_pallas.7} parent=11 // pred_region
          _
        $region20: #{bottleneck1d_pallas.7} parent=11 // pred_fallthru
          _
        // Predicated region
        $region21: #{bottleneck1d_pallas.7} parent=11 // pred_check
          %p308 = pneg %p109
        $region22: #{bottleneck1d_pallas.7} parent=11 // pred_check_branch
          %310 = sbr.rel (%p308) target = $region24
        $region23: #{bottleneck1d_pallas.7} parent=11 // pred_region
          _
        $region24: #{bottleneck1d_pallas.7} parent=11 // pred_fallthru
          _
        // Predicated region
        $region25: #{bottleneck1d_pallas.7} parent=11 // pred_check
          %p311 = pneg %p130
        $region26: #{bottleneck1d_pallas.7} parent=11 // pred_check_branch
          %313 = sbr.rel (%p311) target = $region28
        $region27: #{bottleneck1d_pallas.7} parent=11 // pred_region
          _
        $region28: #{bottleneck1d_pallas.7} parent=11 // pred_fallthru
          _
        // Predicated region
        $region29: #{bottleneck1d_pallas.7} parent=11 // pred_check
          %p314 = pneg %p151
        $region30: #{bottleneck1d_pallas.7} parent=11 // pred_check_branch
          %316 = sbr.rel (%p314) target = $region32
        $region31: #{bottleneck1d_pallas.7} parent=11 // pred_region
          _
        $region32: #{bottleneck1d_pallas.7} parent=11 // pred_fallthru
          _
        // Predicated region
        $region33: #{bottleneck1d_pallas.7} parent=11 // pred_check
          %p317 = pneg %p172
        $region34: #{bottleneck1d_pallas.7} parent=11 // pred_check_branch
          %319 = sbr.rel (%p317) target = $region36
        $region35: #{bottleneck1d_pallas.7} parent=11 // pred_region
          _
        $region36: #{bottleneck1d_pallas.7} parent=11 // pred_fallthru
          _
        // Predicated region
        $region37: #{bottleneck1d_pallas.7} parent=11 // pred_check
          %p320 = pneg %p193
        $region38: #{bottleneck1d_pallas.7} parent=11 // pred_check_branch
          %322 = sbr.rel (%p320) target = $region40
        $region39: #{bottleneck1d_pallas.7} parent=11 // pred_region
          _
        $region40: #{bottleneck1d_pallas.7} parent=11 // pred_fallthru
          _
        // Predicated region
        $region41: #{bottleneck1d_pallas.7} parent=11 // pred_check
          %p323 = pneg %p214
        $region42: #{bottleneck1d_pallas.7} parent=11 // pred_check_branch
          %325 = sbr.rel (%p323) target = $region44
        $region43: #{bottleneck1d_pallas.7} parent=11 // pred_region
          _
        $region44: #{bottleneck1d_pallas.7} parent=11 // pred_fallthru
          _
        // Predicated region
        $region45: #{bottleneck1d_pallas.7} parent=11 // pred_check
          %p326 = pneg %p235
        $region46: #{bottleneck1d_pallas.7} parent=11 // pred_check_branch
          %328 = sbr.rel (%p326) target = $region48
        $region47: #{bottleneck1d_pallas.7} parent=11 // pred_region
          _
        $region48: #{bottleneck1d_pallas.7} parent=11 // pred_fallthru
          _
      $region12: #{bottleneck1d_pallas.7} parent=5 // pred_fallthru
        _
      %p329 = scmp.lt.s32.totalorder %s20, 2
      // Predicated region
      $region49: #{bottleneck1d_pallas.7} parent=5 // pred_check
        %p330 = pneg %p329
      $region50: #{bottleneck1d_pallas.7} parent=5 // pred_check_branch
        %332 = sbr.rel (%p330) target = $region52
      $region51: #{bottleneck1d_pallas.7} parent=5 // pred_region
        // Predicated region
        $region53: #{bottleneck1d_pallas.7} parent=51 // pred_check
          %p333 = pneg %p40
        $region54: #{bottleneck1d_pallas.7} parent=51 // pred_check_branch
          %335 = sbr.rel (%p333) target = $region56
        $region55: #{bottleneck1d_pallas.7} parent=51 // pred_region
          %p336 = scmp.lt.s32.totalorder %s20, 1
          %s337 = scalar_select %p336, %s20, 1
          %s338 = smul.addr %s337, 4
          %s339 = scalar_lea.vmem %s0, %s338
        $region56: #{bottleneck1d_pallas.7} parent=51 // pred_fallthru
          _
        // Predicated region
        $region57: #{bottleneck1d_pallas.7} parent=51 // pred_check
          %p340 = pneg %p255
        $region58: #{bottleneck1d_pallas.7} parent=51 // pred_check_branch
          %342 = sbr.rel (%p340) target = $region60
        $region59: #{bottleneck1d_pallas.7} parent=51 // pred_region
          %p343 = scmp.lt.s32.totalorder %s20, 1
          %s344 = scalar_select %p343, %s20, 1
          %s345 = smul.addr %s344, 4
          %s346 = smul.addr %s345, 8
          %s347 = scalar_lea.vmem %s10, %s346
        $region60: #{bottleneck1d_pallas.7} parent=51 // pred_fallthru
          _
      $region52: #{bottleneck1d_pallas.7} parent=5 // pred_fallthru
        _
      %p348 = scmp.le.s32.totalorder 1, %s20
      %p349 = scmp.lt.s32.totalorder %s20, 3
      %p350 = pnand %p348, %p349
      %p351 = pneg %p350
      // Predicated region
      $region61: #{bottleneck1d_pallas.7} parent=5 // pred_check
        _
      $region62: #{bottleneck1d_pallas.7} parent=5 // pred_check_branch
        %353 = sbr.rel (%p350) target = $region64
      $region63: #{bottleneck1d_pallas.7} parent=5 // pred_region
        %s354 = ssub.s32 %s20, 1
        %p355 = scmp.lt.s32.totalorder %s25, 1
        %s356 = scalar_select %p355, %s25, 1
        %s357 = smul.addr %s356, 4
        %s358 = scalar_lea.vmem %s0, %s357
        %p359 = pneg %p46
        %p360 = pneg %p43
        %p361 = pneg %p67
        %p362 = pneg %p64
        %p363 = pneg %p88
        %p364 = pneg %p85
        %p365 = pneg %p109
        %p366 = pneg %p106
        %p367 = pneg %p130
        %p368 = pneg %p127
        %p369 = pneg %p151
        %p370 = pneg %p148
        %p371 = pneg %p172
        %p372 = pneg %p169
        %p373 = pneg %p193
        %p374 = pneg %p190
        %p375 = pneg %p214
        %p376 = pneg %p211
        %p377 = pneg %p235
        %p378 = pneg %p232
        %p379 = scmp.lt.s32.totalorder %s25, 1
        %s380 = scalar_select %p379, %s25, 1
        %s381 = smul.addr %s380, 4
        %s382 = smul.addr %s381, 8
        %s383 = scalar_lea.vmem %s10, %s382
        %p384 = pneg %p261
        %p385 = pneg %p258
        %p386 = pneg %p287
        %p387 = pneg %p284
        %s388 = sand.u32 %s274, 1
        %s389 = scalar_lea.sflag [#allocation3], %s388
        %s390 = sand.u32 %s274, 1
        %s391 = smul.addr %s390, 32
        %s392 = scalar_lea.vmem [#allocation2], %s391
        %p393 = scmp.lt.s32.totalorder %s25, 1
        %s394 = scalar_select %p393, %s25, 1
        %s395 = smul.addr %s394, 4
        %s396 = scalar_lea.vmem %s0, %s395
        %p397 = scmp.lt.s32.totalorder %s25, 1
        %s398 = scalar_select %p397, %s25, 1
        %s399 = smul.addr %s398, 4
        %s400 = smul.addr %s399, 8
        %s401 = scalar_lea.vmem %s10, %s400
        %v403 = vld [vmem:[%s1] sm:$0xff]
        %v404 = vld [vmem:[%s1 + $0x8] sm:$0xff]
        %vm405 = vcmask 7168
        %v406 = vsel %vm405, %v403, 0.0
        %v407 = vsel %vm405, %v404, 0.0
        %v408 = vadd.f32 %v406, %v407
        %v409 = vmul.f32 %v408, 0.00390625
        %v410 = vld [vmem:[%s2] sm:$0xff]
        %v411 = vld [vmem:[%s2 + $0x8] sm:$0xff]
        %v412 = vsel %vm405, %v410, 0.0
        %v413 = vsel %vm405, %v411, 0.0
        %v414 = vadd.f32 %v412, %v413
        %v415 = vmul.f32 %v414, 0.00390625
        %v416 = vmul.f32 %v409, %v409
        %v417 = vsub.f32 %v415, %v416
        %v418 = vmax.f32 %v417, 0.0
        %v419 = vld [vmem:[%s3] sm:$0xff]
        %v420 = vadd.f32 %v418, 1e-05
        %v421 = vrsqrt.pop %v420
        %v422 = vmul.f32 %v421, %v420
        %v423 = vmul.f32 %v422, %v421
        %v424 = vmul.f32 0.5, %v423
        %v425 = vsub.f32 1.5, %v424
        %v426 = vmul.f32 %v421, %v425
        %vm427 = vweird.f32 %v420
        %vm428 = vweird.f32 %v421
        %vm429 = vmor %vm427, %vm428
        %v430 = vsel %vm429, %v421, %v426
        %v431 = vmul.f32 %v419, %v430
        %v432 = vld [vmem:[%s4] sm:$0xff]
        %v433 = vmul.f32 %v409, %v431
        %v434 = vsub.f32 %v432, %v433
        %v435 = vld [vmem:[%s6] sm:$0xff]
        %v436 = vld [vmem:[%s6 + $0x8] sm:$0xff]
        %v437 = vld [vmem:[%s6 + $0x10] sm:$0xff]
        %v438 = vld [vmem:[%s6 + $0x18] sm:$0xff]
        %v439 = vld [vmem:[%s6 + $0x20] sm:$0xff]
        %v440 = vld [vmem:[%s6 + $0x28] sm:$0xff]
        %v441 = vld [vmem:[%s6 + $0x30] sm:$0xff]
        %v442 = vld [vmem:[%s6 + $0x38] sm:$0xff]
        %v443 = vsel %vm405, %v435, 0.0
        %v444 = vsel %vm405, %v439, 0.0
        %v445 = vadd.f32 %v443, %v444
        %v446 = vsel %vm405, %v436, 0.0
        %v447 = vsel %vm405, %v440, 0.0
        %v448 = vadd.f32 %v446, %v447
        %v449 = vsel %vm405, %v437, 0.0
        %v450 = vsel %vm405, %v441, 0.0
        %v451 = vadd.f32 %v449, %v450
        %v452 = vsel %vm405, %v438, 0.0
        %v453 = vsel %vm405, %v442, 0.0
        %v454 = vadd.f32 %v452, %v453
        %v455 = vmul.f32 %v445, 0.00390625
        %v456 = vmul.f32 %v448, 0.00390625
        %v457 = vmul.f32 %v451, 0.00390625
        %v458 = vmul.f32 %v454, 0.00390625
        %v459 = vld [vmem:[%s7] sm:$0xff]
        %v460 = vld [vmem:[%s7 + $0x8] sm:$0xff]
        %v461 = vld [vmem:[%s7 + $0x10] sm:$0xff]
        %v462 = vld [vmem:[%s7 + $0x18] sm:$0xff]
        %v463 = vld [vmem:[%s7 + $0x20] sm:$0xff]
        %v464 = vld [vmem:[%s7 + $0x28] sm:$0xff]
        %v465 = vld [vmem:[%s7 + $0x30] sm:$0xff]
        %v466 = vld [vmem:[%s7 + $0x38] sm:$0xff]
        %v467 = vsel %vm405, %v459, 0.0
        %v468 = vsel %vm405, %v463, 0.0
        %v469 = vadd.f32 %v467, %v468
        %v470 = vsel %vm405, %v460, 0.0
        %v471 = vsel %vm405, %v464, 0.0
        %v472 = vadd.f32 %v470, %v471
        %v473 = vsel %vm405, %v461, 0.0
        %v474 = vsel %vm405, %v465, 0.0
        %v475 = vadd.f32 %v473, %v474
        %v476 = vsel %vm405, %v462, 0.0
        %v477 = vsel %vm405, %v466, 0.0
        %v478 = vadd.f32 %v476, %v477
        %v479 = vmul.f32 %v469, 0.00390625
        %v480 = vmul.f32 %v472, 0.00390625
        %v481 = vmul.f32 %v475, 0.00390625
        %v482 = vmul.f32 %v478, 0.00390625
        %v483 = vmul.f32 %v455, %v455
        %v484 = vmul.f32 %v456, %v456
        %v485 = vmul.f32 %v457, %v457
        %v486 = vmul.f32 %v458, %v458
        %v487 = vsub.f32 %v479, %v483
        %v488 = vsub.f32 %v480, %v484
        %v489 = vsub.f32 %v481, %v485
        %v490 = vsub.f32 %v482, %v486
        %v491 = vmax.f32 %v487, 0.0
        %v492 = vmax.f32 %v488, 0.0
        %v493 = vmax.f32 %v489, 0.0
        %v494 = vmax.f32 %v490, 0.0
        %v495 = vld [vmem:[%s8] sm:$0xff]
        %v496 = vld [vmem:[%s8 + $0x8] sm:$0xff]
        %v497 = vld [vmem:[%s8 + $0x10] sm:$0xff]
        %v498 = vld [vmem:[%s8 + $0x18] sm:$0xff]
        %v499 = vadd.f32 %v491, 1e-05
        %v500 = vadd.f32 %v492, 1e-05
        %v501 = vadd.f32 %v493, 1e-05
        %v502 = vadd.f32 %v494, 1e-05
        %v503 = vrsqrt.pop %v499
        %v504 = vmul.f32 %v503, %v499
        %v505 = vmul.f32 %v504, %v503
        %v506 = vmul.f32 0.5, %v505
        %v507 = vsub.f32 1.5, %v506
        %v508 = vmul.f32 %v503, %v507
        %vm509 = vweird.f32 %v499
        %vm510 = vweird.f32 %v503
        %vm511 = vmor %vm509, %vm510
        %v512 = vsel %vm511, %v503, %v508
        %v513 = vrsqrt.pop %v500
        %v514 = vmul.f32 %v513, %v500
        %v515 = vmul.f32 %v514, %v513
        %v516 = vmul.f32 0.5, %v515
        %v517 = vsub.f32 1.5, %v516
        %v518 = vmul.f32 %v513, %v517
        %vm519 = vweird.f32 %v500
        %vm520 = vweird.f32 %v513
        %vm521 = vmor %vm519, %vm520
        %v522 = vsel %vm521, %v513, %v518
        %v523 = vrsqrt.pop %v501
        %v524 = vmul.f32 %v523, %v501
        %v525 = vmul.f32 %v524, %v523
        %v526 = vmul.f32 0.5, %v525
        %v527 = vsub.f32 1.5, %v526
        %v528 = vmul.f32 %v523, %v527
        %vm529 = vweird.f32 %v501
        %vm530 = vweird.f32 %v523
        %vm531 = vmor %vm529, %vm530
        %v532 = vsel %vm531, %v523, %v528
        %v533 = vrsqrt.pop %v502
        %v534 = vmul.f32 %v533, %v502
        %v535 = vmul.f32 %v534, %v533
        %v536 = vmul.f32 0.5, %v535
        %v537 = vsub.f32 1.5, %v536
        %v538 = vmul.f32 %v533, %v537
        %vm539 = vweird.f32 %v502
        %vm540 = vweird.f32 %v533
        %vm541 = vmor %vm539, %vm540
        %v542 = vsel %vm541, %v533, %v538
        %v543 = vmul.f32 %v495, %v512
        %v544 = vmul.f32 %v496, %v522
        %v545 = vmul.f32 %v497, %v532
        %v546 = vmul.f32 %v498, %v542
        %v547 = vld [vmem:[%s9] sm:$0xff]
        %v548 = vld [vmem:[%s9 + $0x8] sm:$0xff]
        %v549 = vld [vmem:[%s9 + $0x10] sm:$0xff]
        %v550 = vld [vmem:[%s9 + $0x18] sm:$0xff]
        %v551 = vmul.f32 %v455, %v543
        %v552 = vmul.f32 %v456, %v544
        %v553 = vmul.f32 %v457, %v545
        %v554 = vmul.f32 %v458, %v546
        %v555 = vsub.f32 %v547, %v551
        %v556 = vsub.f32 %v548, %v552
        %v557 = vsub.f32 %v549, %v553
        %v558 = vsub.f32 %v550, %v554
        %v559 = vld [vmem:[%s5] sm:$0xf]
        %v560 = vld [vmem:[%s5 + $0x4] sm:$0xf]
        %v561 = vld [vmem:[%s5 + $0x8] sm:$0xf]
        %v562 = vld [vmem:[%s5 + $0xc] sm:$0xf]
        %v563 = vld [vmem:[%s396] sm:$0xf]
        %v564 = vunpack.c.l.bf16 %v563
        %566 = vset.pattern.permute.xlu0 0
        %567 = vperm.xlu0 %566, %v431
        %v568 = vpop.permute.xlu0 %567
        %v570 = vmul.f32 %v564, %v568
        %572 = vset.pattern.permute.xlu0 0
        %573 = vperm.xlu0 %572, %v434
        %v574 = vpop.permute.xlu0 %573
        %v576 = vadd.f32 %v570, %v574
        %v577 = vmax.f32 %v576, 0.0
        %v578 = vpack.c.bf16 %v577, %v577
        %v583 = vunpack.c.l.b16 %v559
        %v584 = vunpack.c.l.b16 %v560
        %v585 = vunpack.c.l.b16 %v561
        %v586 = vunpack.c.l.b16 %v562
        %v587 = vpack.c.b16 %v584, %v583
        %v588 = vpack.c.b16 %v586, %v585
        %vm589 = vcmask 64512
        %v591 = vsel %vm589, %v587, 0
        %v594 = vsel %vm589, %v588, 0
        %vm596 = vcmask 1043456
        %v598 = vsel %vm596, %v578, 0
        %600 = vmatpush.bf16.msra.mxu0 0
        %601 = vmatpush.bf16.msra.mxu0 0
        %602 = vmatpush.bf16.msra.mxu0 0
        %603 = vmatpush.bf16.msra.mxu0 0
        %604 = vmatpush.bf16.msra.mxu0 0
        %605 = vmatpush.bf16.msra.mxu0 0
        %606 = vmatpush.bf16.msra.mxu0 0
        %607 = vmatpush.bf16.msra.mxu0 %v598
        %608 = vmatmul.bf16.gmra.mxu0 %v591
        %v609 = vpop.f32.mrf.mxu0
        %v610 = vadd.f32 0.0, %v609
        %v611 = vpop.f32.mrf.mxu0
        %v612 = vadd.f32 0.0, %v611
        %613 = vmatmul.bf16.gmra.mxu0 %v594
        %v614 = vpop.f32.mrf.mxu0
        %v615 = vadd.f32 0.0, %v614
        %v616 = vpop.f32.mrf.mxu0
        %v617 = vadd.f32 0.0, %v616
        %618 = vdwg.mxu0
        %620 = vset.pattern.permute.xlu0 0
        %621 = vperm.xlu0 %620, %v543
        %v622 = vpop.permute.xlu0 %621
        %625 = vset.pattern.permute.xlu0 0
        %626 = vperm.xlu0 %625, %v544
        %v627 = vpop.permute.xlu0 %626
        %630 = vset.pattern.permute.xlu0 0
        %631 = vperm.xlu0 %630, %v545
        %v632 = vpop.permute.xlu0 %631
        %635 = vset.pattern.permute.xlu0 0
        %636 = vperm.xlu0 %635, %v546
        %v637 = vpop.permute.xlu0 %636
        %v639 = vmul.f32 %v610, %v622
        %v640 = vmul.f32 %v612, %v627
        %v641 = vmul.f32 %v615, %v632
        %v642 = vmul.f32 %v617, %v637
        %644 = vset.pattern.permute.xlu0 0
        %645 = vperm.xlu0 %644, %v555
        %v646 = vpop.permute.xlu0 %645
        %649 = vset.pattern.permute.xlu0 0
        %650 = vperm.xlu0 %649, %v556
        %v651 = vpop.permute.xlu0 %650
        %654 = vset.pattern.permute.xlu0 0
        %655 = vperm.xlu0 %654, %v557
        %v656 = vpop.permute.xlu0 %655
        %659 = vset.pattern.permute.xlu0 0
        %660 = vperm.xlu0 %659, %v558
        %v661 = vpop.permute.xlu0 %660
        %v663 = vadd.f32 %v639, %v646
        %v664 = vadd.f32 %v640, %v651
        %v665 = vadd.f32 %v641, %v656
        %v666 = vadd.f32 %v642, %v661
        %v667 = vld [vmem:[%s401] sm:$0xff]
        %v668 = vld [vmem:[%s401 + $0x8] sm:$0xff]
        %v669 = vld [vmem:[%s401 + $0x10] sm:$0xff]
        %v670 = vld [vmem:[%s401 + $0x18] sm:$0xff]
        %v671 = vadd.f32 %v663, %v667
        %v672 = vadd.f32 %v664, %v668
        %v673 = vadd.f32 %v665, %v669
        %v674 = vadd.f32 %v666, %v670
        %v675 = vmax.f32 %v671, 0.0
        %v676 = vmax.f32 %v672, 0.0
        %v677 = vmax.f32 %v673, 0.0
        %v678 = vmax.f32 %v674, 0.0
        %679 = vst [vmem:[%s392] sm:$0xff] %v675
        %680 = vst [vmem:[%s392 + $0x8] sm:$0xff] %v676
        %681 = vst [vmem:[%s392 + $0x10] sm:$0xff] %v677
        %682 = vst [vmem:[%s392 + $0x18] sm:$0xff] %v678
        %s683 = sand.u32 %s274, 1
        %s684 = scalar_lea.sflag [#allocation3], %s683
        %s685 = sand.u32 %s274, 1
        %s686 = smul.addr %s685, 32
        %s687 = scalar_lea.vmem [#allocation2], %s686
        // Predicated region
        $region65: #{bottleneck1d_pallas.7} parent=63 // pred_check
          %p688 = pneg %p284
        $region66: #{bottleneck1d_pallas.7} parent=63 // pred_check_branch
          %690 = sbr.rel (%p688) target = $region68
        $region67: #{bottleneck1d_pallas.7} parent=63 // pred_region
          %692 = vsyncadd %s684, 0
          %s693 = smul.addr %s25, 4
          %s694 = smul.addr %s693, 8
          %s695 = scalar_lea.hbm %s11, %s694
          %s696 = sshll.u32 %s687, 4
          %s697 = int_to_ptr.vmem [resolvable:$true] %s696
          %s698 = sshll.u32 %s695, 4
          %s699 = int_to_ptr.hbm [resolvable:$true] %s698
          %704 = dma.vmem_to_hbm [thread:$0]  %s697, 512, %s699, %s684, 128, 128, 8
        $region68: #{bottleneck1d_pallas.7} parent=63 // pred_fallthru
          _
      $region64: #{bottleneck1d_pallas.7} parent=5 // pred_fallthru
        _
      %p705 = scmp.le.s32.totalorder 2, %s20
      // Predicated region
      $region69: #{bottleneck1d_pallas.7} parent=5 // pred_check
        %p706 = pneg %p705
      $region70: #{bottleneck1d_pallas.7} parent=5 // pred_check_branch
        %708 = sbr.rel (%p706) target = $region72
      $region71: #{bottleneck1d_pallas.7} parent=5 // pred_region
        %s709 = ssub.s32 %s20, 2
        // Predicated region
        $region73: #{bottleneck1d_pallas.7} parent=71 // pred_check
          %p710 = pneg %p290
        $region74: #{bottleneck1d_pallas.7} parent=71 // pred_check_branch
          %712 = sbr.rel (%p710) target = $region76
        $region75: #{bottleneck1d_pallas.7} parent=71 // pred_region
          %s713 = sand.u32 %s275, 1
          %s714 = scalar_lea.sflag [#allocation3], %s713
          %s715 = sand.u32 %s275, 1
          %s716 = smul.addr %s715, 32
          %s717 = scalar_lea.vmem [#allocation2], %s716
          %719 = dma.done %s714, 512
        $region76: #{bottleneck1d_pallas.7} parent=71 // pred_fallthru
          _
      $region72: #{bottleneck1d_pallas.7} parent=5 // pred_fallthru
        _
    $region6: #{bottleneck1d_pallas.7} parent=1 // loop_footer
      %s24 = sadd.s32 1, %s20
    $region7: #{bottleneck1d_pallas.7} parent=1 // loop_footer_branch
      %19 = sbr.rel target = $region3
    $region8: #{bottleneck1d_pallas.7} parent=1 // loop_exit
      _
    %720 = vsyncpa [#allocation3], 1
    %s721 = scalar_lea.sflag [#allocation3], 1
    %722 = vsyncpa %s721, 1

</llo_original>
